<compile_context>
chip_gen: v5e
topology: v5e:2x2
jax: 0.10.0
libtpu: 0.0.40
codegen_flags: <defaults>
</compile_context>

<pallas_src>
import functools

import numpy as np

import jax
import jax.numpy as jnp
from jax import lax
from jax.experimental import pallas as pl
from jax.experimental.pallas import tpu as pltpu


def _attention_kernel(feats_ref, attn_ref, mask_ref, w12_ref, smalls_ref,
                      o_ref, *, C, W, NHW):
    """Whole batch in a single step, lane-dense (C, N*H*W) layout.

    feats_ref:  (C, NHW)      attn_ref: (1, NHW)
    mask_ref:   (9, NHW)      precomputed 0/1 border masks, one row per 3x3 tap
    w12_ref:    (2, C, 9*C)   conv1/conv2 weights in im2col layout (Cout, 9*Cin)
    smalls_ref: (C, 4)        [:,0]=b1, [:,1]=b2, [:,2]=w3, [0,3]=b3
    o_ref:      (1, NHW)
    """
    # Channel-broadcast attention gating: (C, NHW) * (1, NHW).
    x = feats_ref[...] * attn_ref[...]

    masks = mask_ref[...]                       # (9, NHW), one load
    w12 = w12_ref[...]                          # (2, C, 9C), one load
    smalls = smalls_ref[...]                    # (C, 4), one load
    b1 = smalls[:, 0:1]                         # (C, 1)
    b2 = smalls[:, 1:2]                         # (C, 1)
    w3 = smalls[:, 2:3]                         # (C, 1)
    b3 = smalls[0:1, 3:4]                       # (1, 1)

    # Tap lane shifts for the 3x3 window (dy, dx) in row-major tap order.
    shifts = tuple(dy * W + dx for dy in (-1, 0, 1) for dx in (-1, 0, 1))

    def conv3x3_relu(inp, w2d, b):
        # im2col slab: rows [k*C : (k+1)*C] hold tap k = roll(inp) * mask_k.
        taps = []
        for k, s in enumerate(shifts):
            t = inp if s == 0 else pltpu.roll(inp, (-s) % NHW, axis=1)
            taps.append(t * masks[k:k + 1, :])          # zero padding border
        slab = jnp.concatenate(taps, axis=0)            # (9*C, NHW)
        acc = jnp.dot(w2d, slab,                        # one MXU dot per layer
                      preferred_element_type=jnp.float32,
                      precision=lax.Precision.HIGHEST)
        return jnp.maximum(acc + b, 0.0)

    out = conv3x3_relu(x, w12[0], b1)
    out = conv3x3_relu(out, w12[1], b2)

    # 1x1 conv C -> 1 as a sublane reduce, then sigmoid.
    logits = jnp.sum(out * w3, axis=0, keepdims=True)   # (1, NHW)
    o_ref[...] = jax.nn.sigmoid(logits + b3)


def _edge_masks(H, W, N):
    """Static (9, N*H*W) 0/1 masks implementing the padding=1 zero border."""
    yy, xx = np.meshgrid(np.arange(H), np.arange(W), indexing="ij")
    rows = []
    for dy in (-1, 0, 1):
        for dx in (-1, 0, 1):
            m = ((yy + dy >= 0) & (yy + dy < H) &
                 (xx + dx >= 0) & (xx + dx < W))
            rows.append(m.reshape(-1).astype(np.float32))
    mask_hw = np.stack(rows, axis=0)                    # (9, H*W)
    return np.tile(mask_hw, (1, N))                     # (9, N*H*W)


def attention_module_pallas(feats_nchw, attn_nchw, params):
    """feats_nchw: (N, C, H, W), attn_nchw: (N, 1, H, W) -> (N, 1, H, W)."""
    w1, b1, w2, b2, w3, b3 = params
    N, C, H, W = feats_nchw.shape
    HW = H * W
    NHW = N * HW

    # Lane-dense plumbing (pure reshapes/transposes, wrapper-side):
    # batch folded into the lane axis: lane p = n*HW + y*W + x.
    feats = (feats_nchw.reshape(N, C, HW).transpose(1, 0, 2)
             .reshape(C, NHW).astype(jnp.float32))
    attn = attn_nchw.reshape(1, NHW).astype(jnp.float32)

    # HWIO (3,3,Cin,Cout) -> im2col (Cout, 9*Cin), column index = k*Cin + ci.
    def im2col_w(w_hwio):
        return (w_hwio.reshape(9, C, C).transpose(2, 0, 1)
                .reshape(C, 9 * C).astype(jnp.float32))

    w12 = jnp.stack([im2col_w(w1), im2col_w(w2)], axis=0)      # (2, C, 9C)

    smalls = jnp.zeros((C, 4), jnp.float32)
    smalls = smalls.at[:, 0].set(b1.astype(jnp.float32))
    smalls = smalls.at[:, 1].set(b2.astype(jnp.float32))
    smalls = smalls.at[:, 2].set(w3.reshape(C).astype(jnp.float32))
    smalls = smalls.at[0, 3].set(b3.reshape(()).astype(jnp.float32))

    masks = jnp.asarray(_edge_masks(H, W, N))                  # (9, NHW)

    kernel = functools.partial(_attention_kernel, C=C, W=W, NHW=NHW)

    out_flat = pl.pallas_call(
        kernel,
        out_shape=jax.ShapeDtypeStruct((1, NHW), jnp.float32),
        grid_spec=pltpu.PrefetchScalarGridSpec(
            num_scalar_prefetch=0,
            grid=(1,),   # whole batch in one step: nothing to amortize over
            in_specs=[
                pl.BlockSpec((C, NHW), lambda i: (0, 0)),
                pl.BlockSpec((1, NHW), lambda i: (0, 0)),
                pl.BlockSpec((9, NHW), lambda i: (0, 0)),
                pl.BlockSpec((2, C, 9 * C), lambda i: (0, 0, 0)),
                pl.BlockSpec((C, 4), lambda i: (0, 0)),
            ],
            out_specs=pl.BlockSpec((1, NHW), lambda i: (0, 0)),
        ),
        compiler_params=pltpu.CompilerParams(
            dimension_semantics=("arbitrary",)),
    )(feats, attn, masks, w12, smalls)

    return out_flat.reshape(N, 1, H, W)   # back to NCHW (N, 1, H, W)


def init_params(key, dim):
    """Deterministic init matching the module's shapes.

    conv weights: kaiming_normal_ (fan_in, gain=sqrt(2)); biases: PyTorch
    default conv bias init U(-1/sqrt(fan_in), 1/sqrt(fan_in)).
    Weights stored HWIO (kh, kw, Cin, Cout); conv3 weight stored as (Cin, 1).
    """
    k = jax.random.split(key, 6)
    fan_in_33 = dim * 3 * 3
    fan_in_11 = dim * 1 * 1
    std33 = (2.0 / fan_in_33) ** 0.5
    std11 = (2.0 / fan_in_11) ** 0.5
    w1 = std33 * jax.random.normal(k[0], (3, 3, dim, dim), jnp.float32)
    w2 = std33 * jax.random.normal(k[1], (3, 3, dim, dim), jnp.float32)
    w3 = std11 * jax.random.normal(k[2], (dim, 1), jnp.float32)
    bnd33 = 1.0 / (fan_in_33 ** 0.5)
    bnd11 = 1.0 / (fan_in_11 ** 0.5)
    b1 = jax.random.uniform(k[3], (dim,), jnp.float32, -bnd33, bnd33)
    b2 = jax.random.uniform(k[4], (dim,), jnp.float32, -bnd33, bnd33)
    b3 = jax.random.uniform(k[5], (1,), jnp.float32, -bnd11, bnd11)
    return (w1, b1, w2, b2, w3, b3)


def attention_module_ref(feats_nchw, attn_nchw, params):
    """Pure-JAX reference (lax.conv) mirroring the PyTorch forward."""
    w1, b1, w2, b2, w3, b3 = params
    N, C, H, W = feats_nchw.shape
    x = jnp.transpose(feats_nchw * attn_nchw, (0, 2, 3, 1))  # NHWC

    def conv(x_nhwc, w_hwio, pad):
        return lax.conv_general_dilated(
            x_nhwc, w_hwio, window_strides=(1, 1), padding=pad,
            dimension_numbers=("NHWC", "HWIO", "NHWC"),
            precision=lax.Precision.HIGHEST)

    out = jax.nn.relu(conv(x, w1, "SAME") + b1)
    out = jax.nn.relu(conv(out, w2, "SAME") + b2)
    out = jax.nn.sigmoid(conv(out, w3.reshape(1, 1, C, 1), "VALID") + b3)
    return jnp.transpose(out, (0, 3, 1, 2))


if __name__ == "__main__":
    N, C, H, W = 2, 4, 16, 16  # dim = 4

    key = jax.random.PRNGKey(0)
    kf, ka, kp = jax.random.split(key, 3)
    feats = jax.random.normal(kf, (N, C, H, W), jnp.float32)
    attn = jax.random.uniform(ka, (N, 1, H, W), jnp.float32)
    params = init_params(kp, C)

    out = attention_module_pallas(feats, attn, params)
    out = jax.block_until_ready(out)

    ref = attention_module_ref(feats, attn, params)
    assert out.shape == (N, 1, H, W), out.shape
    assert bool(jnp.allclose(out, ref, atol=3e-5, rtol=1e-4)), (
        "mismatch vs reference")

    print("KERNEL_OK")
</pallas_src>

<mosaic_0001>
module attributes {stable_mosaic.version = 11 : i64} {
  func.func @_attention_kernel(%arg0: i32, %arg1: memref<4x512xf32, #tpu.memory_space<vmem>>, %arg2: memref<1x512xf32, #tpu.memory_space<vmem>>, %arg3: memref<9x512xf32, #tpu.memory_space<vmem>>, %arg4: memref<2x4x36xf32, #tpu.memory_space<vmem>>, %arg5: memref<4x4xf32, #tpu.memory_space<vmem>>, %arg6: memref<1x512xf32, #tpu.memory_space<vmem>>) attributes {dimension_semantics = [#tpu.dimension_semantics<arbitrary>], iteration_bounds = array<i64: 1>, scalar_prefetch = 0 : i64, scratch_operands = 0 : i64, tpu.core_type = #tpu.core_type<tc>, window_params = [{pipeline_mode = #tpu.pipeline_mode<synchronous>, transform_indices = @transform_0, window_bounds = array<i64: 4, 512>}, {pipeline_mode = #tpu.pipeline_mode<synchronous>, transform_indices = @transform_1, window_bounds = array<i64: 1, 512>}, {pipeline_mode = #tpu.pipeline_mode<synchronous>, transform_indices = @transform_2, window_bounds = array<i64: 9, 512>}, {pipeline_mode = #tpu.pipeline_mode<synchronous>, transform_indices = @transform_3, window_bounds = array<i64: 2, 4, 36>}, {pipeline_mode = #tpu.pipeline_mode<synchronous>, transform_indices = @transform_4, window_bounds = array<i64: 4, 4>}, {pipeline_mode = #tpu.pipeline_mode<synchronous>, transform_indices = @transform_5, window_bounds = array<i64: 1, 512>}]} {
    %c0 = arith.constant 0 : index
    %c0_0 = arith.constant 0 : index
    %0 = vector.load %arg1[%c0, %c0_0] : memref<4x512xf32, #tpu.memory_space<vmem>>, vector<4x512xf32>
    %c0_1 = arith.constant 0 : index
    %c0_2 = arith.constant 0 : index
    %1 = vector.load %arg2[%c0_1, %c0_2] : memref<1x512xf32, #tpu.memory_space<vmem>>, vector<1x512xf32>
    %2 = vector.broadcast %1 : vector<1x512xf32> to vector<4x512xf32>
    %3 = arith.mulf %0, %2 : vector<4x512xf32>
    %c0_3 = arith.constant 0 : index
    %c0_4 = arith.constant 0 : index
    %4 = vector.load %arg3[%c0_3, %c0_4] : memref<9x512xf32, #tpu.memory_space<vmem>>, vector<9x512xf32>
    %c0_5 = arith.constant 0 : index
    %c0_6 = arith.constant 0 : index
    %c0_7 = arith.constant 0 : index
    %5 = vector.load %arg4[%c0_5, %c0_6, %c0_7] : memref<2x4x36xf32, #tpu.memory_space<vmem>>, vector<2x4x36xf32>
    %c0_8 = arith.constant 0 : index
    %c0_9 = arith.constant 0 : index
    %6 = vector.load %arg5[%c0_8, %c0_9] : memref<4x4xf32, #tpu.memory_space<vmem>>, vector<4x4xf32>
    %7 = vector.extract_strided_slice %6 {offsets = [0, 0], sizes = [4, 1], strides = [1, 1]} : vector<4x4xf32> to vector<4x1xf32>
    %8 = vector.extract_strided_slice %6 {offsets = [0, 1], sizes = [4, 1], strides = [1, 1]} : vector<4x4xf32> to vector<4x1xf32>
    %9 = vector.extract_strided_slice %6 {offsets = [0, 2], sizes = [4, 1], strides = [1, 1]} : vector<4x4xf32> to vector<4x1xf32>
    %10 = vector.extract_strided_slice %6 {offsets = [0, 3], sizes = [1, 1], strides = [1, 1]} : vector<4x4xf32> to vector<1x1xf32>
    %11 = vector.extract_strided_slice %5 {offsets = [0, 0, 0], sizes = [1, 4, 36], strides = [1, 1, 1]} : vector<2x4x36xf32> to vector<1x4x36xf32>
    %12 = vector.shape_cast %11 : vector<1x4x36xf32> to vector<4x36xf32>
    %c17_i32 = arith.constant 17 : i32
    %13 = tpu.dynamic_rotate %3 by %c17_i32 dim 1 : vector<4x512xf32>, i32 -> vector<4x512xf32>
    %14 = vector.extract_strided_slice %4 {offsets = [0, 0], sizes = [1, 512], strides = [1, 1]} : vector<9x512xf32> to vector<1x512xf32>
    %15 = vector.broadcast %14 : vector<1x512xf32> to vector<4x512xf32>
    %16 = arith.mulf %13, %15 : vector<4x512xf32>
    %c16_i32 = arith.constant 16 : i32
    %17 = tpu.dynamic_rotate %3 by %c16_i32 dim 1 : vector<4x512xf32>, i32 -> vector<4x512xf32>
    %18 = vector.extract_strided_slice %4 {offsets = [1, 0], sizes = [1, 512], strides = [1, 1]} : vector<9x512xf32> to vector<1x512xf32>
    %19 = vector.broadcast %18 : vector<1x512xf32> to vector<4x512xf32>
    %20 = arith.mulf %17, %19 : vector<4x512xf32>
    %c15_i32 = arith.constant 15 : i32
    %21 = tpu.dynamic_rotate %3 by %c15_i32 dim 1 : vector<4x512xf32>, i32 -> vector<4x512xf32>
    %22 = vector.extract_strided_slice %4 {offsets = [2, 0], sizes = [1, 512], strides = [1, 1]} : vector<9x512xf32> to vector<1x512xf32>
    %23 = vector.broadcast %22 : vector<1x512xf32> to vector<4x512xf32>
    %24 = arith.mulf %21, %23 : vector<4x512xf32>
    %c1_i32 = arith.constant 1 : i32
    %25 = tpu.dynamic_rotate %3 by %c1_i32 dim 1 : vector<4x512xf32>, i32 -> vector<4x512xf32>
    %26 = vector.extract_strided_slice %4 {offsets = [3, 0], sizes = [1, 512], strides = [1, 1]} : vector<9x512xf32> to vector<1x512xf32>
    %27 = vector.broadcast %26 : vector<1x512xf32> to vector<4x512xf32>
    %28 = arith.mulf %25, %27 : vector<4x512xf32>
    %29 = vector.extract_strided_slice %4 {offsets = [4, 0], sizes = [1, 512], strides = [1, 1]} : vector<9x512xf32> to vector<1x512xf32>
    %30 = vector.broadcast %29 : vector<1x512xf32> to vector<4x512xf32>
    %31 = arith.mulf %3, %30 : vector<4x512xf32>
    %c511_i32 = arith.constant 511 : i32
    %32 = tpu.dynamic_rotate %3 by %c511_i32 dim 1 : vector<4x512xf32>, i32 -> vector<4x512xf32>
    %33 = vector.extract_strided_slice %4 {offsets = [5, 0], sizes = [1, 512], strides = [1, 1]} : vector<9x512xf32> to vector<1x512xf32>
    %34 = vector.broadcast %33 : vector<1x512xf32> to vector<4x512xf32>
    %35 = arith.mulf %32, %34 : vector<4x512xf32>
    %c497_i32 = arith.constant 497 : i32
    %36 = tpu.dynamic_rotate %3 by %c497_i32 dim 1 : vector<4x512xf32>, i32 -> vector<4x512xf32>
    %37 = vector.extract_strided_slice %4 {offsets = [6, 0], sizes = [1, 512], strides = [1, 1]} : vector<9x512xf32> to vector<1x512xf32>
    %38 = vector.broadcast %37 : vector<1x512xf32> to vector<4x512xf32>
    %39 = arith.mulf %36, %38 : vector<4x512xf32>
    %c496_i32 = arith.constant 496 : i32
    %40 = tpu.dynamic_rotate %3 by %c496_i32 dim 1 : vector<4x512xf32>, i32 -> vector<4x512xf32>
    %41 = vector.extract_strided_slice %4 {offsets = [7, 0], sizes = [1, 512], strides = [1, 1]} : vector<9x512xf32> to vector<1x512xf32>
    %42 = vector.broadcast %41 : vector<1x512xf32> to vector<4x512xf32>
    %43 = arith.mulf %40, %42 : vector<4x512xf32>
    %c495_i32 = arith.constant 495 : i32
    %44 = tpu.dynamic_rotate %3 by %c495_i32 dim 1 : vector<4x512xf32>, i32 -> vector<4x512xf32>
    %45 = vector.extract_strided_slice %4 {offsets = [8, 0], sizes = [1, 512], strides = [1, 1]} : vector<9x512xf32> to vector<1x512xf32>
    %46 = vector.broadcast %45 : vector<1x512xf32> to vector<4x512xf32>
    %47 = arith.mulf %44, %46 : vector<4x512xf32>
    %48 = tpu.concatenate %16, %20, %24, %28, %31, %35, %39, %43, %47 in 0 : vector<4x512xf32>, vector<4x512xf32>, vector<4x512xf32>, vector<4x512xf32>, vector<4x512xf32>, vector<4x512xf32>, vector<4x512xf32>, vector<4x512xf32>, vector<4x512xf32> -> vector<36x512xf32>
    %cst = arith.constant dense<0.000000e+00> : vector<4x512xf32>
    %49 = tpu.matmul %12, %48, %cst {dimension_numbers = #tpu.dot_dimension_numbers<[1], [0], [0], [1], [0, 0, 1, 1], [], []>, precision = #tpu.contract_precision<fp32>} : vector<4x36xf32>, vector<36x512xf32>, vector<4x512xf32> -> vector<4x512xf32>
    %50 = vector.broadcast %7 : vector<4x1xf32> to vector<4x512xf32>
    %51 = arith.addf %49, %50 : vector<4x512xf32>
    %cst_10 = arith.constant 0.000000e+00 : f32
    %52 = vector.broadcast %cst_10 : f32 to vector<4x512xf32>
    %53 = arith.maximumf %51, %52 : vector<4x512xf32>
    %54 = vector.extract_strided_slice %5 {offsets = [1, 0, 0], sizes = [1, 4, 36], strides = [1, 1, 1]} : vector<2x4x36xf32> to vector<1x4x36xf32>
    %55 = vector.shape_cast %54 : vector<1x4x36xf32> to vector<4x36xf32>
    %c17_i32_11 = arith.constant 17 : i32
    %56 = tpu.dynamic_rotate %53 by %c17_i32_11 dim 1 : vector<4x512xf32>, i32 -> vector<4x512xf32>
    %57 = vector.extract_strided_slice %4 {offsets = [0, 0], sizes = [1, 512], strides = [1, 1]} : vector<9x512xf32> to vector<1x512xf32>
    %58 = vector.broadcast %57 : vector<1x512xf32> to vector<4x512xf32>
    %59 = arith.mulf %56, %58 : vector<4x512xf32>
    %c16_i32_12 = arith.constant 16 : i32
    %60 = tpu.dynamic_rotate %53 by %c16_i32_12 dim 1 : vector<4x512xf32>, i32 -> vector<4x512xf32>
    %61 = vector.extract_strided_slice %4 {offsets = [1, 0], sizes = [1, 512], strides = [1, 1]} : vector<9x512xf32> to vector<1x512xf32>
    %62 = vector.broadcast %61 : vector<1x512xf32> to vector<4x512xf32>
    %63 = arith.mulf %60, %62 : vector<4x512xf32>
    %c15_i32_13 = arith.constant 15 : i32
    %64 = tpu.dynamic_rotate %53 by %c15_i32_13 dim 1 : vector<4x512xf32>, i32 -> vector<4x512xf32>
    %65 = vector.extract_strided_slice %4 {offsets = [2, 0], sizes = [1, 512], strides = [1, 1]} : vector<9x512xf32> to vector<1x512xf32>
    %66 = vector.broadcast %65 : vector<1x512xf32> to vector<4x512xf32>
    %67 = arith.mulf %64, %66 : vector<4x512xf32>
    %c1_i32_14 = arith.constant 1 : i32
    %68 = tpu.dynamic_rotate %53 by %c1_i32_14 dim 1 : vector<4x512xf32>, i32 -> vector<4x512xf32>
    %69 = vector.extract_strided_slice %4 {offsets = [3, 0], sizes = [1, 512], strides = [1, 1]} : vector<9x512xf32> to vector<1x512xf32>
    %70 = vector.broadcast %69 : vector<1x512xf32> to vector<4x512xf32>
    %71 = arith.mulf %68, %70 : vector<4x512xf32>
    %72 = vector.extract_strided_slice %4 {offsets = [4, 0], sizes = [1, 512], strides = [1, 1]} : vector<9x512xf32> to vector<1x512xf32>
    %73 = vector.broadcast %72 : vector<1x512xf32> to vector<4x512xf32>
    %74 = arith.mulf %53, %73 : vector<4x512xf32>
    %c511_i32_15 = arith.constant 511 : i32
    %75 = tpu.dynamic_rotate %53 by %c511_i32_15 dim 1 : vector<4x512xf32>, i32 -> vector<4x512xf32>
    %76 = vector.extract_strided_slice %4 {offsets = [5, 0], sizes = [1, 512], strides = [1, 1]} : vector<9x512xf32> to vector<1x512xf32>
    %77 = vector.broadcast %76 : vector<1x512xf32> to vector<4x512xf32>
    %78 = arith.mulf %75, %77 : vector<4x512xf32>
    %c497_i32_16 = arith.constant 497 : i32
    %79 = tpu.dynamic_rotate %53 by %c497_i32_16 dim 1 : vector<4x512xf32>, i32 -> vector<4x512xf32>
    %80 = vector.extract_strided_slice %4 {offsets = [6, 0], sizes = [1, 512], strides = [1, 1]} : vector<9x512xf32> to vector<1x512xf32>
    %81 = vector.broadcast %80 : vector<1x512xf32> to vector<4x512xf32>
    %82 = arith.mulf %79, %81 : vector<4x512xf32>
    %c496_i32_17 = arith.constant 496 : i32
    %83 = tpu.dynamic_rotate %53 by %c496_i32_17 dim 1 : vector<4x512xf32>, i32 -> vector<4x512xf32>
    %84 = vector.extract_strided_slice %4 {offsets = [7, 0], sizes = [1, 512], strides = [1, 1]} : vector<9x512xf32> to vector<1x512xf32>
    %85 = vector.broadcast %84 : vector<1x512xf32> to vector<4x512xf32>
    %86 = arith.mulf %83, %85 : vector<4x512xf32>
    %c495_i32_18 = arith.constant 495 : i32
    %87 = tpu.dynamic_rotate %53 by %c495_i32_18 dim 1 : vector<4x512xf32>, i32 -> vector<4x512xf32>
    %88 = vector.extract_strided_slice %4 {offsets = [8, 0], sizes = [1, 512], strides = [1, 1]} : vector<9x512xf32> to vector<1x512xf32>
    %89 = vector.broadcast %88 : vector<1x512xf32> to vector<4x512xf32>
    %90 = arith.mulf %87, %89 : vector<4x512xf32>
    %91 = tpu.concatenate %59, %63, %67, %71, %74, %78, %82, %86, %90 in 0 : vector<4x512xf32>, vector<4x512xf32>, vector<4x512xf32>, vector<4x512xf32>, vector<4x512xf32>, vector<4x512xf32>, vector<4x512xf32>, vector<4x512xf32>, vector<4x512xf32> -> vector<36x512xf32>
    %cst_19 = arith.constant dense<0.000000e+00> : vector<4x512xf32>
    %92 = tpu.matmul %55, %91, %cst_19 {dimension_numbers = #tpu.dot_dimension_numbers<[1], [0], [0], [1], [0, 0, 1, 1], [], []>, precision = #tpu.contract_precision<fp32>} : vector<4x36xf32>, vector<36x512xf32>, vector<4x512xf32> -> vector<4x512xf32>
    %93 = vector.broadcast %8 : vector<4x1xf32> to vector<4x512xf32>
    %94 = arith.addf %92, %93 : vector<4x512xf32>
    %cst_20 = arith.constant 0.000000e+00 : f32
    %95 = vector.broadcast %cst_20 : f32 to vector<4x512xf32>
    %96 = arith.maximumf %94, %95 : vector<4x512xf32>
    %97 = vector.broadcast %9 : vector<4x1xf32> to vector<4x512xf32>
    %98 = arith.mulf %96, %97 : vector<4x512xf32>
    %cst_21 = arith.constant dense<0.000000e+00> : vector<512xf32>
    %99 = vector.multi_reduction <add>, %98, %cst_21 [0] : vector<4x512xf32> to vector<512xf32>
    %100 = vector.shape_cast %99 : vector<512xf32> to vector<1x512xf32>
    %101 = vector.broadcast %10 : vector<1x1xf32> to vector<1x512xf32>
    %102 = arith.addf %100, %101 : vector<1x512xf32>
    %103 = arith.negf %102 : vector<1x512xf32>
    %104 = math.exp %103 : vector<1x512xf32>
    %cst_22 = arith.constant 1.000000e+00 : f32
    %105 = vector.broadcast %cst_22 : f32 to vector<1x512xf32>
    %106 = arith.addf %105, %104 : vector<1x512xf32>
    %107 = arith.divf %105, %106 : vector<1x512xf32>
    %c0_23 = arith.constant 0 : index
    %c0_24 = arith.constant 0 : index
    %108 = vector.load %arg6[%c0_23, %c0_24] : memref<1x512xf32, #tpu.memory_space<vmem>>, vector<1x512xf32>
    tpu.vector_store %arg6[%c0_23, %c0_24], %107 {strides = array<i32>} : memref<1x512xf32, #tpu.memory_space<vmem>>, vector<1x512xf32>,
    return
  }
  func.func @transform_0(%arg0: i32) -> (i32, i32) {
    %c0_i32 = arith.constant 0 : i32
    %c0_i32_0 = arith.constant 0 : i32
    %c0_i32_1 = arith.constant 0 : i32
    return %c0_i32, %c0_i32_0 : i32, i32
  }
  func.func @transform_1(%arg0: i32) -> (i32, i32) {
    %c0_i32 = arith.constant 0 : i32
    %c0_i32_0 = arith.constant 0 : i32
    %c0_i32_1 = arith.constant 0 : i32
    return %c0_i32, %c0_i32_0 : i32, i32
  }
  func.func @transform_2(%arg0: i32) -> (i32, i32) {
    %c0_i32 = arith.constant 0 : i32
    %c0_i32_0 = arith.constant 0 : i32
    %c0_i32_1 = arith.constant 0 : i32
    return %c0_i32, %c0_i32_0 : i32, i32
  }
  func.func @transform_3(%arg0: i32) -> (i32, i32, i32) {
    %c0_i32 = arith.constant 0 : i32
    %c0_i32_0 = arith.constant 0 : i32
    %c0_i32_1 = arith.constant 0 : i32
    %c0_i32_2 = arith.constant 0 : i32
    return %c0_i32, %c0_i32_0, %c0_i32_1 : i32, i32, i32
  }
  func.func @transform_4(%arg0: i32) -> (i32, i32) {
    %c0_i32 = arith.constant 0 : i32
    %c0_i32_0 = arith.constant 0 : i32
    %c0_i32_1 = arith.constant 0 : i32
    return %c0_i32, %c0_i32_0 : i32, i32
  }
  func.func @transform_5(%arg0: i32) -> (i32, i32) {
    %c0_i32 = arith.constant 0 : i32
    %c0_i32_0 = arith.constant 0 : i32
    %c0_i32_1 = arith.constant 0 : i32
    return %c0_i32, %c0_i32_0 : i32, i32
  }
}

</mosaic_0001>

<llo_original>
// kernel: tpu_custom_call.1
$region0: #{tpu_custom_call.1}
  #allocation0 [shape = 'u32[]', space=smem, size = 0x4, offset = 0x4, fixed_abs, tag = 'smem constant byte address 0x4 - core index']
  #allocation1 [shape = 'u32[72,128]{1,0:T(1,128)}', space=vmem, size = 0x9000, scoped, tag = 'internal scratch']
  %s0 = inlined_call_operand.hbm [shape: f32[4,512], index: 0, kind: input, shape index: {}]
  %s1 = inlined_call_operand.hbm [shape: f32[1,512], index: 1, kind: input, shape index: {}]
  %s2 = inlined_call_operand.hbm [shape: f32[9,512], index: 2, kind: input, shape index: {}]
  %s3 = inlined_call_operand.hbm [shape: f32[2,4,36], index: 3, kind: input, shape index: {}]
  %s4 = inlined_call_operand.hbm [shape: f32[4,4], index: 4, kind: input, shape index: {}]
  %s5 = inlined_call_operand.hbm [shape: f32[1,512], index: 5, kind: output, shape index: {}]
  %s6 = sld [smem:[#allocation0]]
  $region50: #{tpu_custom_call.1} parent=0
    _
  %s8 = ssub.s32 1, %s6
  %s9 = scalar_select 0, %s8, %s6
  $region1: #{tpu_custom_call.1} parent=0
    #allocation2 [shape = 'u8[8192]{0}', space=vmem, size = 0x2000, scoped, tag = 'input window, operand 0, single buffered']
    #allocation3 [shape = 's32[1]{0}', space=sflag, size = 0x4, scoped, tag = 'scoped memory for tpu_custom_call.1']
    #allocation4 [shape = 's32[1]{0}', space=sflag, size = 0x4, scoped, tag = 'scoped memory for tpu_custom_call.1']
    #allocation5 [shape = 'u8[2048]{0}', space=vmem, size = 0x800, scoped, tag = 'input window, operand 1, single buffered']
    #allocation6 [shape = 's32[1]{0}', space=sflag, size = 0x4, scoped, tag = 'scoped memory for tpu_custom_call.1']
    #allocation7 [shape = 'u8[32768]{0}', space=vmem, size = 0x8000, scoped, tag = 'input window, operand 2, single buffered']
    #allocation8 [shape = 'u8[4096]{0}', space=vmem, size = 0x1000, scoped, tag = 'input window, operand 3, single buffered']
    #allocation9 [shape = 's32[1]{0}', space=sflag, size = 0x4, scoped, tag = 'scoped memory for tpu_custom_call.1']
    #allocation10 [shape = 'u8[2048]{0}', space=vmem, size = 0x800, scoped, tag = 'input window, operand 4, single buffered']
    #allocation11 [shape = 'u8[2048]{0}', space=vmem, size = 0x800, scoped, tag = 'output window, operand 0, single buffered']
    %10 = vsyncpa [#allocation3], 0
    %11 = vsyncpa [#allocation6], 0
    %12 = vsyncpa [#allocation9], 0
    %13 = vsyncpa [#allocation4], 0
    // Predicated region
    $region2: #{tpu_custom_call.1} parent=1 // pred_check
      _
    $region3: #{tpu_custom_call.1} parent=1 // pred_check_branch
      %15 = sbr.rel (0) target = $region5
    $region4: #{tpu_custom_call.1} parent=1 // pred_region
      %17 = vsyncadd [#allocation3], 0
      %s19 = sshll.u32 %s0, 4
      %s20 = int_to_ptr.hbm [resolvable:$true] %s19
      %s21 = sshll.u32 [#allocation2], 4
      %s22 = int_to_ptr.vmem [resolvable:$true] %s21
      %24 = dma.hbm_to_vmem [thread:$0]  %s20, 256, %s22, [#allocation3]
    $region5: #{tpu_custom_call.1} parent=1 // pred_fallthru
      _
    // Predicated region
    $region6: #{tpu_custom_call.1} parent=1 // pred_check
      _
    $region7: #{tpu_custom_call.1} parent=1 // pred_check_branch
      %26 = sbr.rel (0) target = $region9
    $region8: #{tpu_custom_call.1} parent=1 // pred_region
      %28 = vsyncadd [#allocation6], 0
      %s30 = sshll.u32 %s1, 4
      %s31 = int_to_ptr.hbm [resolvable:$true] %s30
      %s32 = sshll.u32 [#allocation5], 4
      %s33 = int_to_ptr.vmem [resolvable:$true] %s32
      %35 = dma.hbm_to_vmem [thread:$0]  %s31, 64, %s33, [#allocation6]
    $region9: #{tpu_custom_call.1} parent=1 // pred_fallthru
      _
    // Predicated region
    $region10: #{tpu_custom_call.1} parent=1 // pred_check
      _
    $region11: #{tpu_custom_call.1} parent=1 // pred_check_branch
      %37 = sbr.rel (0) target = $region13
    $region12: #{tpu_custom_call.1} parent=1 // pred_region
      %39 = vsyncadd [#allocation6], 0
      %s40 = sshll.u32 %s2, 4
      %s41 = int_to_ptr.hbm [resolvable:$true] %s40
      %s42 = sshll.u32 [#allocation7], 4
      %s43 = int_to_ptr.vmem [resolvable:$true] %s42
      %48 = dma.hbm_to_vmem [thread:$0]  %s41, 1024, %s43, [#allocation6], 512, 512, 32
    $region13: #{tpu_custom_call.1} parent=1 // pred_fallthru
      _
    // Predicated region
    $region14: #{tpu_custom_call.1} parent=1 // pred_check
      _
    $region15: #{tpu_custom_call.1} parent=1 // pred_check_branch
      %50 = sbr.rel (0) target = $region17
    $region16: #{tpu_custom_call.1} parent=1 // pred_region
      %52 = vsyncadd [#allocation9], 0
      %s53 = sshll.u32 %s3, 4
      %s54 = int_to_ptr.hbm [resolvable:$true] %s53
      %s55 = sshll.u32 [#allocation8], 4
      %s56 = int_to_ptr.vmem [resolvable:$true] %s55
      %61 = dma.hbm_to_vmem [thread:$0]  %s54, 128, %s56, [#allocation9], 64, 64, 4
    $region17: #{tpu_custom_call.1} parent=1 // pred_fallthru
      _
    // Predicated region
    $region18: #{tpu_custom_call.1} parent=1 // pred_check
      _
    $region19: #{tpu_custom_call.1} parent=1 // pred_check_branch
      %63 = sbr.rel (0) target = $region21
    $region20: #{tpu_custom_call.1} parent=1 // pred_region
      %65 = vsyncadd [#allocation9], 0
      %s67 = sshll.u32 %s4, 4
      %s68 = int_to_ptr.hbm [resolvable:$true] %s67
      %s69 = sshll.u32 [#allocation10], 4
      %s70 = int_to_ptr.vmem [resolvable:$true] %s69
      %72 = dma.hbm_to_vmem [thread:$0]  %s68, 64, %s70, [#allocation9]
    $region21: #{tpu_custom_call.1} parent=1 // pred_fallthru
      _
    // Predicated region
    $region22: #{tpu_custom_call.1} parent=1 // pred_check
      _
    $region23: #{tpu_custom_call.1} parent=1 // pred_check_branch
      %74 = sbr.rel (0) target = $region25
    $region24: #{tpu_custom_call.1} parent=1 // pred_region
      %76 = dma.done [#allocation3], 256
    $region25: #{tpu_custom_call.1} parent=1 // pred_fallthru
      _
    // Predicated region
    $region26: #{tpu_custom_call.1} parent=1 // pred_check
      _
    $region27: #{tpu_custom_call.1} parent=1 // pred_check_branch
      %78 = sbr.rel (0) target = $region29
    $region28: #{tpu_custom_call.1} parent=1 // pred_region
      %80 = dma.done [#allocation6], 64
    $region29: #{tpu_custom_call.1} parent=1 // pred_fallthru
      _
    // Predicated region
    $region30: #{tpu_custom_call.1} parent=1 // pred_check
      _
    $region31: #{tpu_custom_call.1} parent=1 // pred_check_branch
      %82 = sbr.rel (0) target = $region33
    $region32: #{tpu_custom_call.1} parent=1 // pred_region
      %84 = dma.done [#allocation6], 1024
    $region33: #{tpu_custom_call.1} parent=1 // pred_fallthru
      _
    // Predicated region
    $region34: #{tpu_custom_call.1} parent=1 // pred_check
      _
    $region35: #{tpu_custom_call.1} parent=1 // pred_check_branch
      %86 = sbr.rel (0) target = $region37
    $region36: #{tpu_custom_call.1} parent=1 // pred_region
      %88 = dma.done [#allocation9], 128
    $region37: #{tpu_custom_call.1} parent=1 // pred_fallthru
      _
    // Predicated region
    $region38: #{tpu_custom_call.1} parent=1 // pred_check
      _
    $region39: #{tpu_custom_call.1} parent=1 // pred_check_branch
      %90 = sbr.rel (0) target = $region41
    $region40: #{tpu_custom_call.1} parent=1 // pred_region
      %92 = dma.done [#allocation9], 64
    $region41: #{tpu_custom_call.1} parent=1 // pred_fallthru
      _
    %v93 = vld [vmem:[#allocation2] sm:$0xff]
    %v94 = vld [vmem:[#allocation2 + $0x8] sm:$0xff]
    %v95 = vld [vmem:[#allocation5] sm:$0xf]
    %v97 = vperm.slane %v95, 0
    %v98 = vperm.slane %v95, 1
    %v99 = vperm.slane %v95, 2
    %v100 = vperm.slane %v95, 3
    %v101 = vrot.slane %v98, 4
    %v102 = vrot.slane %v100, 4
    %vm103 = vcmask 1043456
    %v104 = vsel %vm103, %v97, %v101
    %v105 = vsel %vm103, %v99, %v102
    %v108 = vmul.f32 %v93, %v104
    %v109 = vmul.f32 %v94, %v105
    %v110 = vld [vmem:[#allocation7] sm:$0xff]
    %v111 = vld [vmem:[#allocation7 + $0x8] sm:$0xff]
    %v112 = vld [vmem:[#allocation7 + $0x10] sm:$0xff]
    %v113 = vld [vmem:[#allocation7 + $0x18] sm:$0xff]
    %v114 = vld [vmem:[#allocation7 + $0x20] sm:$0x1]
    %v115 = vld [vmem:[#allocation7 + $0x28] sm:$0x1]
    %v116 = vld [vmem:[#allocation7 + $0x30] sm:$0x1]
    %v117 = vld [vmem:[#allocation7 + $0x38] sm:$0x1]
    %v118 = vld [vmem:[#allocation8] sm:$0xf]
    %v119 = vld [vmem:[#allocation8 + $0x4] sm:$0xf]
    %v120 = vld [vmem:[#allocation10] sm:$0xf]
    %123 = vst [vmem:[#allocation1] ss:$2 sm:$0xff] %v108
    %s124 = scalar_lea.vmem [#allocation1], 16
    %125 = vst [vmem:[%s124] ss:$2 sm:$0xff] %v109
    %v126 = vld.sshfl [vmem:[#allocation1] sm:$0xff pattern:$0x75316420]
    %v127 = vld.sshfl [vmem:[#allocation1 + $0x8] sm:$0xff pattern:$0x75316420]
    %v128 = vld.sshfl [vmem:[#allocation1 + $0x10] sm:$0xff pattern:$0x75316420]
    %v129 = vld.sshfl [vmem:[#allocation1 + $0x18] sm:$0xff pattern:$0x75316420]
    %134 = vrot.lane.b32.xlu0 %v126, 17
    %v135 = vpop.permute.xlu0 %134
    %136 = vrot.lane.b32.xlu0 %v127, 17
    %v137 = vpop.permute.xlu0 %136
    %138 = vrot.lane.b32.xlu0 %v128, 17
    %v139 = vpop.permute.xlu0 %138
    %140 = vrot.lane.b32.xlu0 %v129, 17
    %v141 = vpop.permute.xlu0 %140
    %v142 = vlaneseq
    %v143 = vand.u32 %v142, 127
    %vm144 = vcmp.lt.s32.totalorder %v143, 17
    %v145 = vsel %vm144, %v139, %v141
    %v146 = vsel %vm144, %v137, %v139
    %v147 = vsel %vm144, %v135, %v137
    %v148 = vsel %vm144, %v141, %v135
    %v149 = vperm.slane %v110, 0
    %v150 = vperm.slane %v111, 0
    %v151 = vperm.slane %v112, 0
    %v152 = vperm.slane %v113, 0
    %v153 = vmul.f32 %v148, %v149
    %v154 = vmul.f32 %v147, %v150
    %v155 = vmul.f32 %v146, %v151
    %v156 = vmul.f32 %v145, %v152
    %157 = vst [vmem:[#allocation1] ss:$2 sm:$0xff] %v108
    %s158 = scalar_lea.vmem [#allocation1], 16
    %159 = vst [vmem:[%s158] ss:$2 sm:$0xff] %v109
    %v160 = vld.sshfl [vmem:[#allocation1] sm:$0xff pattern:$0x75316420]
    %v161 = vld.sshfl [vmem:[#allocation1 + $0x8] sm:$0xff pattern:$0x75316420]
    %v162 = vld.sshfl [vmem:[#allocation1 + $0x10] sm:$0xff pattern:$0x75316420]
    %v163 = vld.sshfl [vmem:[#allocation1 + $0x18] sm:$0xff pattern:$0x75316420]
    %168 = vrot.lane.b32.xlu0 %v160, 16
    %v169 = vpop.permute.xlu0 %168
    %170 = vrot.lane.b32.xlu0 %v161, 16
    %v171 = vpop.permute.xlu0 %170
    %172 = vrot.lane.b32.xlu0 %v162, 16
    %v173 = vpop.permute.xlu0 %172
    %174 = vrot.lane.b32.xlu0 %v163, 16
    %v175 = vpop.permute.xlu0 %174
    %vm176 = vcmp.lt.s32.totalorder %v143, 16
    %v177 = vsel %vm176, %v173, %v175
    %v178 = vsel %vm176, %v171, %v173
    %v179 = vsel %vm176, %v169, %v171
    %v180 = vsel %vm176, %v175, %v169
    %v181 = vperm.slane %v110, 1
    %v182 = vperm.slane %v111, 1
    %v183 = vperm.slane %v112, 1
    %v184 = vperm.slane %v113, 1
    %v185 = vmul.f32 %v180, %v181
    %v186 = vmul.f32 %v179, %v182
    %v187 = vmul.f32 %v178, %v183
    %v188 = vmul.f32 %v177, %v184
    %189 = vst [vmem:[#allocation1] ss:$2 sm:$0xff] %v108
    %s190 = scalar_lea.vmem [#allocation1], 16
    %191 = vst [vmem:[%s190] ss:$2 sm:$0xff] %v109
    %v192 = vld.sshfl [vmem:[#allocation1] sm:$0xff pattern:$0x75316420]
    %v193 = vld.sshfl [vmem:[#allocation1 + $0x8] sm:$0xff pattern:$0x75316420]
    %v194 = vld.sshfl [vmem:[#allocation1 + $0x10] sm:$0xff pattern:$0x75316420]
    %v195 = vld.sshfl [vmem:[#allocation1 + $0x18] sm:$0xff pattern:$0x75316420]
    %200 = vrot.lane.b32.xlu0 %v192, 15
    %v201 = vpop.permute.xlu0 %200
    %202 = vrot.lane.b32.xlu0 %v193, 15
    %v203 = vpop.permute.xlu0 %202
    %204 = vrot.lane.b32.xlu0 %v194, 15
    %v205 = vpop.permute.xlu0 %204
    %206 = vrot.lane.b32.xlu0 %v195, 15
    %v207 = vpop.permute.xlu0 %206
    %vm208 = vcmp.lt.s32.totalorder %v143, 15
    %v209 = vsel %vm208, %v205, %v207
    %v210 = vsel %vm208, %v203, %v205
    %v211 = vsel %vm208, %v201, %v203
    %v212 = vsel %vm208, %v207, %v201
    %v213 = vperm.slane %v110, 2
    %v214 = vperm.slane %v111, 2
    %v215 = vperm.slane %v112, 2
    %v216 = vperm.slane %v113, 2
    %v217 = vmul.f32 %v212, %v213
    %v218 = vmul.f32 %v211, %v214
    %v219 = vmul.f32 %v210, %v215
    %v220 = vmul.f32 %v209, %v216
    %221 = vst [vmem:[#allocation1] ss:$2 sm:$0xff] %v108
    %s222 = scalar_lea.vmem [#allocation1], 16
    %223 = vst [vmem:[%s222] ss:$2 sm:$0xff] %v109
    %v224 = vld.sshfl [vmem:[#allocation1] sm:$0xff pattern:$0x75316420]
    %v225 = vld.sshfl [vmem:[#allocation1 + $0x8] sm:$0xff pattern:$0x75316420]
    %v226 = vld.sshfl [vmem:[#allocation1 + $0x10] sm:$0xff pattern:$0x75316420]
    %v227 = vld.sshfl [vmem:[#allocation1 + $0x18] sm:$0xff pattern:$0x75316420]
    %232 = vrot.lane.b32.xlu0 %v224, 1
    %v233 = vpop.permute.xlu0 %232
    %234 = vrot.lane.b32.xlu0 %v225, 1
    %v235 = vpop.permute.xlu0 %234
    %236 = vrot.lane.b32.xlu0 %v226, 1
    %v237 = vpop.permute.xlu0 %236
    %238 = vrot.lane.b32.xlu0 %v227, 1
    %v239 = vpop.permute.xlu0 %238
    %vm240 = vcmp.lt.s32.totalorder %v143, 1
    %v241 = vsel %vm240, %v237, %v239
    %v242 = vsel %vm240, %v235, %v237
    %v243 = vsel %vm240, %v233, %v235
    %v244 = vsel %vm240, %v239, %v233
    %v245 = vperm.slane %v110, 3
    %v246 = vperm.slane %v111, 3
    %v247 = vperm.slane %v112, 3
    %v248 = vperm.slane %v113, 3
    %v249 = vmul.f32 %v244, %v245
    %v250 = vmul.f32 %v243, %v246
    %v251 = vmul.f32 %v242, %v247
    %v252 = vmul.f32 %v241, %v248
    %v253 = vperm.slane %v110, 4
    %v254 = vperm.slane %v111, 4
    %v255 = vperm.slane %v112, 4
    %v256 = vperm.slane %v113, 4
    %v261 = vrot.slane %v254, 4
    %v262 = vrot.slane %v256, 4
    %v263 = vsel %vm103, %v253, %v261
    %v264 = vsel %vm103, %v255, %v262
    %v267 = vmul.f32 %v108, %v263
    %v268 = vmul.f32 %v109, %v264
    %269 = vst [vmem:[#allocation1] ss:$2 sm:$0xff] %v108
    %s270 = scalar_lea.vmem [#allocation1], 16
    %271 = vst [vmem:[%s270] ss:$2 sm:$0xff] %v109
    %v272 = vld.sshfl [vmem:[#allocation1] sm:$0xff pattern:$0x75316420]
    %v273 = vld.sshfl [vmem:[#allocation1 + $0x8] sm:$0xff pattern:$0x75316420]
    %v274 = vld.sshfl [vmem:[#allocation1 + $0x10] sm:$0xff pattern:$0x75316420]
    %v275 = vld.sshfl [vmem:[#allocation1 + $0x18] sm:$0xff pattern:$0x75316420]
    %280 = vrot.lane.b32.xlu0 %v272, 127
    %v281 = vpop.permute.xlu0 %280
    %282 = vrot.lane.b32.xlu0 %v273, 127
    %v283 = vpop.permute.xlu0 %282
    %284 = vrot.lane.b32.xlu0 %v274, 127
    %v285 = vpop.permute.xlu0 %284
    %286 = vrot.lane.b32.xlu0 %v275, 127
    %v287 = vpop.permute.xlu0 %286
    %vm288 = vcmp.lt.s32.totalorder %v143, 127
    %v289 = vsel %vm288, %v285, %v287
    %v290 = vsel %vm288, %v283, %v285
    %v291 = vsel %vm288, %v281, %v283
    %v292 = vsel %vm288, %v287, %v281
    %v293 = vperm.slane %v110, 5
    %v294 = vperm.slane %v111, 5
    %v295 = vperm.slane %v112, 5
    %v296 = vperm.slane %v113, 5
    %v297 = vmul.f32 %v291, %v293
    %v298 = vmul.f32 %v290, %v294
    %v299 = vmul.f32 %v289, %v295
    %v300 = vmul.f32 %v292, %v296
    %301 = vst [vmem:[#allocation1] ss:$2 sm:$0xff] %v108
    %s302 = scalar_lea.vmem [#allocation1], 16
    %303 = vst [vmem:[%s302] ss:$2 sm:$0xff] %v109
    %v304 = vld.sshfl [vmem:[#allocation1] sm:$0xff pattern:$0x75316420]
    %v305 = vld.sshfl [vmem:[#allocation1 + $0x8] sm:$0xff pattern:$0x75316420]
    %v306 = vld.sshfl [vmem:[#allocation1 + $0x10] sm:$0xff pattern:$0x75316420]
    %v307 = vld.sshfl [vmem:[#allocation1 + $0x18] sm:$0xff pattern:$0x75316420]
    %312 = vrot.lane.b32.xlu0 %v304, 113
    %v313 = vpop.permute.xlu0 %312
    %314 = vrot.lane.b32.xlu0 %v305, 113
    %v315 = vpop.permute.xlu0 %314
    %316 = vrot.lane.b32.xlu0 %v306, 113
    %v317 = vpop.permute.xlu0 %316
    %318 = vrot.lane.b32.xlu0 %v307, 113
    %v319 = vpop.permute.xlu0 %318
    %vm320 = vcmp.lt.s32.totalorder %v143, 113
    %v321 = vsel %vm320, %v317, %v319
    %v322 = vsel %vm320, %v315, %v317
    %v323 = vsel %vm320, %v313, %v315
    %v324 = vsel %vm320, %v319, %v313
    %v325 = vperm.slane %v110, 6
    %v326 = vperm.slane %v111, 6
    %v327 = vperm.slane %v112, 6
    %v328 = vperm.slane %v113, 6
    %v329 = vmul.f32 %v323, %v325
    %v330 = vmul.f32 %v322, %v326
    %v331 = vmul.f32 %v321, %v327
    %v332 = vmul.f32 %v324, %v328
    %333 = vst [vmem:[#allocation1] ss:$2 sm:$0xff] %v108
    %s334 = scalar_lea.vmem [#allocation1], 16
    %335 = vst [vmem:[%s334] ss:$2 sm:$0xff] %v109
    %v336 = vld.sshfl [vmem:[#allocation1] sm:$0xff pattern:$0x75316420]
    %v337 = vld.sshfl [vmem:[#allocation1 + $0x8] sm:$0xff pattern:$0x75316420]
    %v338 = vld.sshfl [vmem:[#allocation1 + $0x10] sm:$0xff pattern:$0x75316420]
    %v339 = vld.sshfl [vmem:[#allocation1 + $0x18] sm:$0xff pattern:$0x75316420]
    %344 = vrot.lane.b32.xlu0 %v336, 112
    %v345 = vpop.permute.xlu0 %344
    %346 = vrot.lane.b32.xlu0 %v337, 112
    %v347 = vpop.permute.xlu0 %346
    %348 = vrot.lane.b32.xlu0 %v338, 112
    %v349 = vpop.permute.xlu0 %348
    %350 = vrot.lane.b32.xlu0 %v339, 112
    %v351 = vpop.permute.xlu0 %350
    %vm352 = vcmp.lt.s32.totalorder %v143, 112
    %v353 = vsel %vm352, %v349, %v351
    %v354 = vsel %vm352, %v347, %v349
    %v355 = vsel %vm352, %v345, %v347
    %v356 = vsel %vm352, %v351, %v345
    %v357 = vperm.slane %v110, 7
    %v358 = vperm.slane %v111, 7
    %v359 = vperm.slane %v112, 7
    %v360 = vperm.slane %v113, 7
    %v361 = vmul.f32 %v355, %v357
    %v362 = vmul.f32 %v354, %v358
    %v363 = vmul.f32 %v353, %v359
    %v364 = vmul.f32 %v356, %v360
    %365 = vst [vmem:[#allocation1] ss:$2 sm:$0xff] %v108
    %s366 = scalar_lea.vmem [#allocation1], 16
    %367 = vst [vmem:[%s366] ss:$2 sm:$0xff] %v109
    %v368 = vld.sshfl [vmem:[#allocation1] sm:$0xff pattern:$0x75316420]
    %v369 = vld.sshfl [vmem:[#allocation1 + $0x8] sm:$0xff pattern:$0x75316420]
    %v370 = vld.sshfl [vmem:[#allocation1 + $0x10] sm:$0xff pattern:$0x75316420]
    %v371 = vld.sshfl [vmem:[#allocation1 + $0x18] sm:$0xff pattern:$0x75316420]
    %376 = vrot.lane.b32.xlu0 %v368, 111
    %v377 = vpop.permute.xlu0 %376
    %378 = vrot.lane.b32.xlu0 %v369, 111
    %v379 = vpop.permute.xlu0 %378
    %380 = vrot.lane.b32.xlu0 %v370, 111
    %v381 = vpop.permute.xlu0 %380
    %382 = vrot.lane.b32.xlu0 %v371, 111
    %v383 = vpop.permute.xlu0 %382
    %vm384 = vcmp.lt.s32.totalorder %v143, 111
    %v385 = vsel %vm384, %v381, %v383
    %v386 = vsel %vm384, %v379, %v381
    %v387 = vsel %vm384, %v377, %v379
    %v388 = vsel %vm384, %v383, %v377
    %v389 = vperm.slane %v114, 0
    %v390 = vperm.slane %v115, 0
    %v391 = vperm.slane %v116, 0
    %v392 = vperm.slane %v117, 0
    %v393 = vmul.f32 %v387, %v389
    %v394 = vmul.f32 %v386, %v390
    %v395 = vmul.f32 %v385, %v391
    %v396 = vmul.f32 %v388, %v392
    %v401 = vrot.slane %v185, 4
    %v402 = vrot.slane %v186, 4
    %v403 = vrot.slane %v187, 4
    %v404 = vrot.slane %v188, 4
    %v413 = vrot.slane %v249, 4
    %v414 = vrot.slane %v250, 4
    %v415 = vrot.slane %v251, 4
    %v416 = vrot.slane %v252, 4
    %423 = vst [vmem:[#allocation1] ss:$2 sm:$0xff] %v267
    %s424 = scalar_lea.vmem [#allocation1], 16
    %425 = vst [vmem:[%s424] ss:$2 sm:$0xff] %v268
    %v426 = vld.sshfl [vmem:[#allocation1] sm:$0xff pattern:$0x75316420]
    %v427 = vld.sshfl [vmem:[#allocation1 + $0x8] sm:$0xff pattern:$0x75316420]
    %v428 = vld.sshfl [vmem:[#allocation1 + $0x10] sm:$0xff pattern:$0x75316420]
    %v429 = vld.sshfl [vmem:[#allocation1 + $0x18] sm:$0xff pattern:$0x75316420]
    %v438 = vrot.slane %v297, 4
    %v439 = vrot.slane %v298, 4
    %v440 = vrot.slane %v299, 4
    %v441 = vrot.slane %v300, 4
    %v450 = vrot.slane %v361, 4
    %v451 = vrot.slane %v362, 4
    %v452 = vrot.slane %v363, 4
    %v453 = vrot.slane %v364, 4
    %v458 = vsel %vm103, %v153, %v401
    %v459 = vsel %vm103, %v154, %v402
    %v460 = vsel %vm103, %v155, %v403
    %v461 = vsel %vm103, %v156, %v404
    %v462 = vsel %vm103, %v217, %v413
    %v463 = vsel %vm103, %v218, %v414
    %v464 = vsel %vm103, %v219, %v415
    %v465 = vsel %vm103, %v220, %v416
    %v466 = vsel %vm103, %v426, %v438
    %v467 = vsel %vm103, %v427, %v439
    %v468 = vsel %vm103, %v428, %v440
    %v469 = vsel %vm103, %v429, %v441
    %v470 = vsel %vm103, %v329, %v450
    %v471 = vsel %vm103, %v330, %v451
    %v472 = vsel %vm103, %v331, %v452
    %v473 = vsel %vm103, %v332, %v453
    %475 = vset.pattern.permute.xlu0 0
    %476 = vperm.xlu0 %475, %v120
    %v477 = vpop.permute.xlu0 %476
    %vm479 = vcmask 293888
    %v481 = vsel %vm479, %v118, 0
    %v484 = vsel %vm103, %v393, 0
    %v487 = vsel %vm103, %v394, 0
    %v490 = vsel %vm103, %v395, 0
    %v493 = vsel %vm103, %v396, 0
    %495 = vmatpush.msra.mxu0 0.0
    %496 = vmatpush.msra.mxu0 0.0
    %497 = vmatpush.msra.mxu0 0.0
    %498 = vmatpush.msra.mxu0 0.0
    %499 = vmatpush.msra.mxu0 0.0
    %500 = vmatpush.msra.mxu0 0.0
    %501 = vmatpush.msra.mxu0 0.0
    %502 = vmatpush.msra.mxu0 0.0
    %503 = vmatpush.msra.mxu0 0.0
    %504 = vmatpush.msra.mxu0 0.0
    %505 = vmatpush.msra.mxu0 0.0
    %v506 = vand.u32 %v484, 4294901760
    %507 = vmatpush.msra.mxu0 %v506
    %v508 = vand.u32 %v470, 4294901760
    %509 = vmatpush.msra.mxu0 %v508
    %v510 = vand.u32 %v466, 4294901760
    %511 = vmatpush.msra.mxu0 %v510
    %v512 = vand.u32 %v462, 4294901760
    %513 = vmatpush.msra.mxu0 %v512
    %v514 = vand.u32 %v458, 4294901760
    %515 = vmatpush.msra.mxu0 %v514
    %v516 = vand.u32 %v481, 4294901760
    %v517 = vsub.f32 %v481, %v516
    %v518 = vand.u32 %v517, 4294901760
    %v519 = vsub.f32 %v517, %v518
    %v520 = vand.u32 %v519, 4294901760
    %521 = vmatmul.f32.gmra.mxu0 %v520
    %v522 = vpop.f32.mrf.mxu0
    %v523 = vadd.f32 %v477, %v522
    %524 = vdwg.mxu0
    %525 = vmatpush.msra.mxu0 0.0
    %526 = vmatpush.msra.mxu0 0.0
    %527 = vmatpush.msra.mxu0 0.0
    %528 = vmatpush.msra.mxu0 0.0
    %529 = vmatpush.msra.mxu0 0.0
    %530 = vmatpush.msra.mxu0 0.0
    %531 = vmatpush.msra.mxu0 0.0
    %532 = vmatpush.msra.mxu0 0.0
    %533 = vmatpush.msra.mxu0 0.0
    %534 = vmatpush.msra.mxu0 0.0
    %535 = vmatpush.msra.mxu0 0.0
    %v536 = vand.u32 %v484, 4294901760
    %v537 = vsub.f32 %v484, %v536
    %v538 = vand.u32 %v537, 4294901760
    %v539 = vsub.f32 %v537, %v538
    %v540 = vand.u32 %v539, 4294901760
    %541 = vmatpush.msra.mxu0 %v540
    %v542 = vand.u32 %v470, 4294901760
    %v543 = vsub.f32 %v470, %v542
    %v544 = vand.u32 %v543, 4294901760
    %v545 = vsub.f32 %v543, %v544
    %v546 = vand.u32 %v545, 4294901760
    %547 = vmatpush.msra.mxu0 %v546
    %v548 = vand.u32 %v466, 4294901760
    %v549 = vsub.f32 %v466, %v548
    %v550 = vand.u32 %v549, 4294901760
    %v551 = vsub.f32 %v549, %v550
    %v552 = vand.u32 %v551, 4294901760
    %553 = vmatpush.msra.mxu0 %v552
    %v554 = vand.u32 %v462, 4294901760
    %v555 = vsub.f32 %v462, %v554
    %v556 = vand.u32 %v555, 4294901760
    %v557 = vsub.f32 %v555, %v556
    %v558 = vand.u32 %v557, 4294901760
    %559 = vmatpush.msra.mxu0 %v558
    %v560 = vand.u32 %v458, 4294901760
    %v561 = vsub.f32 %v458, %v560
    %v562 = vand.u32 %v561, 4294901760
    %v563 = vsub.f32 %v561, %v562
    %v564 = vand.u32 %v563, 4294901760
    %565 = vmatpush.msra.mxu0 %v564
    %v566 = vand.u32 %v481, 4294901760
    %567 = vmatmul.f32.gmra.mxu0 %v566
    %v568 = vpop.f32.mrf.mxu0
    %v569 = vadd.f32 %v523, %v568
    %570 = vdwg.mxu0
    %571 = vmatpush.msra.mxu0 0.0
    %572 = vmatpush.msra.mxu0 0.0
    %573 = vmatpush.msra.mxu0 0.0
    %574 = vmatpush.msra.mxu0 0.0
    %575 = vmatpush.msra.mxu0 0.0
    %576 = vmatpush.msra.mxu0 0.0
    %577 = vmatpush.msra.mxu0 0.0
    %578 = vmatpush.msra.mxu0 0.0
    %579 = vmatpush.msra.mxu0 0.0
    %580 = vmatpush.msra.mxu0 0.0
    %581 = vmatpush.msra.mxu0 0.0
    %v582 = vand.u32 %v484, 4294901760
    %v583 = vsub.f32 %v484, %v582
    %584 = vmatpush.msra.mxu0 %v583
    %v585 = vand.u32 %v470, 4294901760
    %v586 = vsub.f32 %v470, %v585
    %587 = vmatpush.msra.mxu0 %v586
    %v588 = vand.u32 %v466, 4294901760
    %v589 = vsub.f32 %v466, %v588
    %590 = vmatpush.msra.mxu0 %v589
    %v591 = vand.u32 %v462, 4294901760
    %v592 = vsub.f32 %v462, %v591
    %593 = vmatpush.msra.mxu0 %v592
    %v594 = vand.u32 %v458, 4294901760
    %v595 = vsub.f32 %v458, %v594
    %596 = vmatpush.msra.mxu0 %v595
    %v597 = vand.u32 %v481, 4294901760
    %v598 = vsub.f32 %v481, %v597
    %599 = vmatmul.f32.gmra.mxu0 %v598
    %v600 = vpop.f32.mrf.mxu0
    %v601 = vadd.f32 %v569, %v600
    %602 = vdwg.mxu0
    %603 = vmatpush.msra.mxu0 0.0
    %604 = vmatpush.msra.mxu0 0.0
    %605 = vmatpush.msra.mxu0 0.0
    %606 = vmatpush.msra.mxu0 0.0
    %607 = vmatpush.msra.mxu0 0.0
    %608 = vmatpush.msra.mxu0 0.0
    %609 = vmatpush.msra.mxu0 0.0
    %610 = vmatpush.msra.mxu0 0.0
    %611 = vmatpush.msra.mxu0 0.0
    %612 = vmatpush.msra.mxu0 0.0
    %613 = vmatpush.msra.mxu0 0.0
    %v614 = vand.u32 %v484, 4294901760
    %615 = vmatpush.msra.mxu0 %v614
    %v616 = vand.u32 %v470, 4294901760
    %617 = vmatpush.msra.mxu0 %v616
    %v618 = vand.u32 %v466, 4294901760
    %619 = vmatpush.msra.mxu0 %v618
    %v620 = vand.u32 %v462, 4294901760
    %621 = vmatpush.msra.mxu0 %v620
    %v622 = vand.u32 %v458, 4294901760
    %623 = vmatpush.msra.mxu0 %v622
    %v624 = vand.u32 %v481, 4294901760
    %v625 = vsub.f32 %v481, %v624
    %v626 = vand.u32 %v625, 4294901760
    %627 = vmatmul.f32.gmra.mxu0 %v626
    %v628 = vpop.f32.mrf.mxu0
    %v629 = vadd.f32 %v601, %v628
    %630 = vdwg.mxu0
    %631 = vmatpush.msra.mxu0 0.0
    %632 = vmatpush.msra.mxu0 0.0
    %633 = vmatpush.msra.mxu0 0.0
    %634 = vmatpush.msra.mxu0 0.0
    %635 = vmatpush.msra.mxu0 0.0
    %636 = vmatpush.msra.mxu0 0.0
    %637 = vmatpush.msra.mxu0 0.0
    %638 = vmatpush.msra.mxu0 0.0
    %639 = vmatpush.msra.mxu0 0.0
    %640 = vmatpush.msra.mxu0 0.0
    %641 = vmatpush.msra.mxu0 0.0
    %v642 = vand.u32 %v484, 4294901760
    %v643 = vsub.f32 %v484, %v642
    %v644 = vand.u32 %v643, 4294901760
    %645 = vmatpush.msra.mxu0 %v644
    %v646 = vand.u32 %v470, 4294901760
    %v647 = vsub.f32 %v470, %v646
    %v648 = vand.u32 %v647, 4294901760
    %649 = vmatpush.msra.mxu0 %v648
    %v650 = vand.u32 %v466, 4294901760
    %v651 = vsub.f32 %v466, %v650
    %v652 = vand.u32 %v651, 4294901760
    %653 = vmatpush.msra.mxu0 %v652
    %v654 = vand.u32 %v462, 4294901760
    %v655 = vsub.f32 %v462, %v654
    %v656 = vand.u32 %v655, 4294901760
    %657 = vmatpush.msra.mxu0 %v656
    %v658 = vand.u32 %v458, 4294901760
    %v659 = vsub.f32 %v458, %v658
    %v660 = vand.u32 %v659, 4294901760
    %661 = vmatpush.msra.mxu0 %v660
    %v662 = vand.u32 %v481, 4294901760
    %663 = vmatmul.f32.gmra.mxu0 %v662
    %v664 = vpop.f32.mrf.mxu0
    %v665 = vadd.f32 %v629, %v664
    %666 = vdwg.mxu0
    %667 = vmatpush.msra.mxu0 0.0
    %668 = vmatpush.msra.mxu0 0.0
    %669 = vmatpush.msra.mxu0 0.0
    %670 = vmatpush.msra.mxu0 0.0
    %671 = vmatpush.msra.mxu0 0.0
    %672 = vmatpush.msra.mxu0 0.0
    %673 = vmatpush.msra.mxu0 0.0
    %674 = vmatpush.msra.mxu0 0.0
    %675 = vmatpush.msra.mxu0 0.0
    %676 = vmatpush.msra.mxu0 0.0
    %677 = vmatpush.msra.mxu0 0.0
    %v678 = vand.u32 %v484, 4294901760
    %679 = vmatpush.msra.mxu0 %v678
    %v680 = vand.u32 %v470, 4294901760
    %681 = vmatpush.msra.mxu0 %v680
    %v682 = vand.u32 %v466, 4294901760
    %683 = vmatpush.msra.mxu0 %v682
    %v684 = vand.u32 %v462, 4294901760
    %685 = vmatpush.msra.mxu0 %v684
    %v686 = vand.u32 %v458, 4294901760
    %687 = vmatpush.msra.mxu0 %v686
    %v688 = vand.u32 %v481, 4294901760
    %689 = vmatmul.f32.gmra.mxu0 %v688
    %v690 = vpop.f32.mrf.mxu0
    %v691 = vadd.f32 %v665, %v690
    %692 = vdwg.mxu0
    %693 = vmatpush.msra.mxu0 0.0
    %694 = vmatpush.msra.mxu0 0.0
    %695 = vmatpush.msra.mxu0 0.0
    %696 = vmatpush.msra.mxu0 0.0
    %697 = vmatpush.msra.mxu0 0.0
    %698 = vmatpush.msra.mxu0 0.0
    %699 = vmatpush.msra.mxu0 0.0
    %700 = vmatpush.msra.mxu0 0.0
    %701 = vmatpush.msra.mxu0 0.0
    %702 = vmatpush.msra.mxu0 0.0
    %703 = vmatpush.msra.mxu0 0.0
    %v704 = vand.u32 %v487, 4294901760
    %705 = vmatpush.msra.mxu0 %v704
    %v706 = vand.u32 %v471, 4294901760
    %707 = vmatpush.msra.mxu0 %v706
    %v708 = vand.u32 %v467, 4294901760
    %709 = vmatpush.msra.mxu0 %v708
    %v710 = vand.u32 %v463, 4294901760
    %711 = vmatpush.msra.mxu0 %v710
    %v712 = vand.u32 %v459, 4294901760
    %713 = vmatpush.msra.mxu0 %v712
    %v714 = vand.u32 %v481, 4294901760
    %v715 = vsub.f32 %v481, %v714
    %v716 = vand.u32 %v715, 4294901760
    %v717 = vsub.f32 %v715, %v716
    %v718 = vand.u32 %v717, 4294901760
    %719 = vmatmul.f32.gmra.mxu0 %v718
    %v720 = vpop.f32.mrf.mxu0
    %v721 = vadd.f32 %v477, %v720
    %722 = vdwg.mxu0
    %723 = vmatpush.msra.mxu0 0.0
    %724 = vmatpush.msra.mxu0 0.0
    %725 = vmatpush.msra.mxu0 0.0
    %726 = vmatpush.msra.mxu0 0.0
    %727 = vmatpush.msra.mxu0 0.0
    %728 = vmatpush.msra.mxu0 0.0
    %729 = vmatpush.msra.mxu0 0.0
    %730 = vmatpush.msra.mxu0 0.0
    %731 = vmatpush.msra.mxu0 0.0
    %732 = vmatpush.msra.mxu0 0.0
    %733 = vmatpush.msra.mxu0 0.0
    %v734 = vand.u32 %v487, 4294901760
    %v735 = vsub.f32 %v487, %v734
    %v736 = vand.u32 %v735, 4294901760
    %v737 = vsub.f32 %v735, %v736
    %v738 = vand.u32 %v737, 4294901760
    %739 = vmatpush.msra.mxu0 %v738
    %v740 = vand.u32 %v471, 4294901760
    %v741 = vsub.f32 %v471, %v740
    %v742 = vand.u32 %v741, 4294901760
    %v743 = vsub.f32 %v741, %v742
    %v744 = vand.u32 %v743, 4294901760
    %745 = vmatpush.msra.mxu0 %v744
    %v746 = vand.u32 %v467, 4294901760
    %v747 = vsub.f32 %v467, %v746
    %v748 = vand.u32 %v747, 4294901760
    %v749 = vsub.f32 %v747, %v748
    %v750 = vand.u32 %v749, 4294901760
    %751 = vmatpush.msra.mxu0 %v750
    %v752 = vand.u32 %v463, 4294901760
    %v753 = vsub.f32 %v463, %v752
    %v754 = vand.u32 %v753, 4294901760
    %v755 = vsub.f32 %v753, %v754
    %v756 = vand.u32 %v755, 4294901760
    %757 = vmatpush.msra.mxu0 %v756
    %v758 = vand.u32 %v459, 4294901760
    %v759 = vsub.f32 %v459, %v758
    %v760 = vand.u32 %v759, 4294901760
    %v761 = vsub.f32 %v759, %v760
    %v762 = vand.u32 %v761, 4294901760
    %763 = vmatpush.msra.mxu0 %v762
    %v764 = vand.u32 %v481, 4294901760
    %765 = vmatmul.f32.gmra.mxu0 %v764
    %v766 = vpop.f32.mrf.mxu0
    %v767 = vadd.f32 %v721, %v766
    %768 = vdwg.mxu0
    %769 = vmatpush.msra.mxu0 0.0
    %770 = vmatpush.msra.mxu0 0.0
    %771 = vmatpush.msra.mxu0 0.0
    %772 = vmatpush.msra.mxu0 0.0
    %773 = vmatpush.msra.mxu0 0.0
    %774 = vmatpush.msra.mxu0 0.0
    %775 = vmatpush.msra.mxu0 0.0
    %776 = vmatpush.msra.mxu0 0.0
    %777 = vmatpush.msra.mxu0 0.0
    %778 = vmatpush.msra.mxu0 0.0
    %779 = vmatpush.msra.mxu0 0.0
    %v780 = vand.u32 %v487, 4294901760
    %v781 = vsub.f32 %v487, %v780
    %782 = vmatpush.msra.mxu0 %v781
    %v783 = vand.u32 %v471, 4294901760
    %v784 = vsub.f32 %v471, %v783
    %785 = vmatpush.msra.mxu0 %v784
    %v786 = vand.u32 %v467, 4294901760
    %v787 = vsub.f32 %v467, %v786
    %788 = vmatpush.msra.mxu0 %v787
    %v789 = vand.u32 %v463, 4294901760
    %v790 = vsub.f32 %v463, %v789
    %791 = vmatpush.msra.mxu0 %v790
    %v792 = vand.u32 %v459, 4294901760
    %v793 = vsub.f32 %v459, %v792
    %794 = vmatpush.msra.mxu0 %v793
    %v795 = vand.u32 %v481, 4294901760
    %v796 = vsub.f32 %v481, %v795
    %797 = vmatmul.f32.gmra.mxu0 %v796
    %v798 = vpop.f32.mrf.mxu0
    %v799 = vadd.f32 %v767, %v798
    %800 = vdwg.mxu0
    %801 = vmatpush.msra.mxu0 0.0
    %802 = vmatpush.msra.mxu0 0.0
    %803 = vmatpush.msra.mxu0 0.0
    %804 = vmatpush.msra.mxu0 0.0
    %805 = vmatpush.msra.mxu0 0.0
    %806 = vmatpush.msra.mxu0 0.0
    %807 = vmatpush.msra.mxu0 0.0
    %808 = vmatpush.msra.mxu0 0.0
    %809 = vmatpush.msra.mxu0 0.0
    %810 = vmatpush.msra.mxu0 0.0
    %811 = vmatpush.msra.mxu0 0.0
    %v812 = vand.u32 %v487, 4294901760
    %813 = vmatpush.msra.mxu0 %v812
    %v814 = vand.u32 %v471, 4294901760
    %815 = vmatpush.msra.mxu0 %v814
    %v816 = vand.u32 %v467, 4294901760
    %817 = vmatpush.msra.mxu0 %v816
    %v818 = vand.u32 %v463, 4294901760
    %819 = vmatpush.msra.mxu0 %v818
    %v820 = vand.u32 %v459, 4294901760
    %821 = vmatpush.msra.mxu0 %v820
    %v822 = vand.u32 %v481, 4294901760
    %v823 = vsub.f32 %v481, %v822
    %v824 = vand.u32 %v823, 4294901760
    %825 = vmatmul.f32.gmra.mxu0 %v824
    %v826 = vpop.f32.mrf.mxu0
    %v827 = vadd.f32 %v799, %v826
    %828 = vdwg.mxu0
    %829 = vmatpush.msra.mxu0 0.0
    %830 = vmatpush.msra.mxu0 0.0
    %831 = vmatpush.msra.mxu0 0.0
    %832 = vmatpush.msra.mxu0 0.0
    %833 = vmatpush.msra.mxu0 0.0
    %834 = vmatpush.msra.mxu0 0.0
    %835 = vmatpush.msra.mxu0 0.0
    %836 = vmatpush.msra.mxu0 0.0
    %837 = vmatpush.msra.mxu0 0.0
    %838 = vmatpush.msra.mxu0 0.0
    %839 = vmatpush.msra.mxu0 0.0
    %v840 = vand.u32 %v487, 4294901760
    %v841 = vsub.f32 %v487, %v840
    %v842 = vand.u32 %v841, 4294901760
    %843 = vmatpush.msra.mxu0 %v842
    %v844 = vand.u32 %v471, 4294901760
    %v845 = vsub.f32 %v471, %v844
    %v846 = vand.u32 %v845, 4294901760
    %847 = vmatpush.msra.mxu0 %v846
    %v848 = vand.u32 %v467, 4294901760
    %v849 = vsub.f32 %v467, %v848
    %v850 = vand.u32 %v849, 4294901760
    %851 = vmatpush.msra.mxu0 %v850
    %v852 = vand.u32 %v463, 4294901760
    %v853 = vsub.f32 %v463, %v852
    %v854 = vand.u32 %v853, 4294901760
    %855 = vmatpush.msra.mxu0 %v854
    %v856 = vand.u32 %v459, 4294901760
    %v857 = vsub.f32 %v459, %v856
    %v858 = vand.u32 %v857, 4294901760
    %859 = vmatpush.msra.mxu0 %v858
    %v860 = vand.u32 %v481, 4294901760
    %861 = vmatmul.f32.gmra.mxu0 %v860
    %v862 = vpop.f32.mrf.mxu0
    %v863 = vadd.f32 %v827, %v862
    %864 = vdwg.mxu0
    %865 = vmatpush.msra.mxu0 0.0
    %866 = vmatpush.msra.mxu0 0.0
    %867 = vmatpush.msra.mxu0 0.0
    %868 = vmatpush.msra.mxu0 0.0
    %869 = vmatpush.msra.mxu0 0.0
    %870 = vmatpush.msra.mxu0 0.0
    %871 = vmatpush.msra.mxu0 0.0
    %872 = vmatpush.msra.mxu0 0.0
    %873 = vmatpush.msra.mxu0 0.0
    %874 = vmatpush.msra.mxu0 0.0
    %875 = vmatpush.msra.mxu0 0.0
    %v876 = vand.u32 %v487, 4294901760
    %877 = vmatpush.msra.mxu0 %v876
    %v878 = vand.u32 %v471, 4294901760
    %879 = vmatpush.msra.mxu0 %v878
    %v880 = vand.u32 %v467, 4294901760
    %881 = vmatpush.msra.mxu0 %v880
    %v882 = vand.u32 %v463, 4294901760
    %883 = vmatpush.msra.mxu0 %v882
    %v884 = vand.u32 %v459, 4294901760
    %885 = vmatpush.msra.mxu0 %v884
    %v886 = vand.u32 %v481, 4294901760
    %887 = vmatmul.f32.gmra.mxu0 %v886
    %v888 = vpop.f32.mrf.mxu0
    %v889 = vadd.f32 %v863, %v888
    %890 = vdwg.mxu0
    %891 = vmatpush.msra.mxu0 0.0
    %892 = vmatpush.msra.mxu0 0.0
    %893 = vmatpush.msra.mxu0 0.0
    %894 = vmatpush.msra.mxu0 0.0
    %895 = vmatpush.msra.mxu0 0.0
    %896 = vmatpush.msra.mxu0 0.0
    %897 = vmatpush.msra.mxu0 0.0
    %898 = vmatpush.msra.mxu0 0.0
    %899 = vmatpush.msra.mxu0 0.0
    %900 = vmatpush.msra.mxu0 0.0
    %901 = vmatpush.msra.mxu0 0.0
    %v902 = vand.u32 %v490, 4294901760
    %903 = vmatpush.msra.mxu0 %v902
    %v904 = vand.u32 %v472, 4294901760
    %905 = vmatpush.msra.mxu0 %v904
    %v906 = vand.u32 %v468, 4294901760
    %907 = vmatpush.msra.mxu0 %v906
    %v908 = vand.u32 %v464, 4294901760
    %909 = vmatpush.msra.mxu0 %v908
    %v910 = vand.u32 %v460, 4294901760
    %911 = vmatpush.msra.mxu0 %v910
    %v912 = vand.u32 %v481, 4294901760
    %v913 = vsub.f32 %v481, %v912
    %v914 = vand.u32 %v913, 4294901760
    %v915 = vsub.f32 %v913, %v914
    %v916 = vand.u32 %v915, 4294901760
    %917 = vmatmul.f32.gmra.mxu0 %v916
    %v918 = vpop.f32.mrf.mxu0
    %v919 = vadd.f32 %v477, %v918
    %920 = vdwg.mxu0
    %921 = vmatpush.msra.mxu0 0.0
    %922 = vmatpush.msra.mxu0 0.0
    %923 = vmatpush.msra.mxu0 0.0
    %924 = vmatpush.msra.mxu0 0.0
    %925 = vmatpush.msra.mxu0 0.0
    %926 = vmatpush.msra.mxu0 0.0
    %927 = vmatpush.msra.mxu0 0.0
    %928 = vmatpush.msra.mxu0 0.0
    %929 = vmatpush.msra.mxu0 0.0
    %930 = vmatpush.msra.mxu0 0.0
    %931 = vmatpush.msra.mxu0 0.0
    %v932 = vand.u32 %v490, 4294901760
    %v933 = vsub.f32 %v490, %v932
    %v934 = vand.u32 %v933, 4294901760
    %v935 = vsub.f32 %v933, %v934
    %v936 = vand.u32 %v935, 4294901760
    %937 = vmatpush.msra.mxu0 %v936
    %v938 = vand.u32 %v472, 4294901760
    %v939 = vsub.f32 %v472, %v938
    %v940 = vand.u32 %v939, 4294901760
    %v941 = vsub.f32 %v939, %v940
    %v942 = vand.u32 %v941, 4294901760
    %943 = vmatpush.msra.mxu0 %v942
    %v944 = vand.u32 %v468, 4294901760
    %v945 = vsub.f32 %v468, %v944
    %v946 = vand.u32 %v945, 4294901760
    %v947 = vsub.f32 %v945, %v946
    %v948 = vand.u32 %v947, 4294901760
    %949 = vmatpush.msra.mxu0 %v948
    %v950 = vand.u32 %v464, 4294901760
    %v951 = vsub.f32 %v464, %v950
    %v952 = vand.u32 %v951, 4294901760
    %v953 = vsub.f32 %v951, %v952
    %v954 = vand.u32 %v953, 4294901760
    %955 = vmatpush.msra.mxu0 %v954
    %v956 = vand.u32 %v460, 4294901760
    %v957 = vsub.f32 %v460, %v956
    %v958 = vand.u32 %v957, 4294901760
    %v959 = vsub.f32 %v957, %v958
    %v960 = vand.u32 %v959, 4294901760
    %961 = vmatpush.msra.mxu0 %v960
    %v962 = vand.u32 %v481, 4294901760
    %963 = vmatmul.f32.gmra.mxu0 %v962
    %v964 = vpop.f32.mrf.mxu0
    %v965 = vadd.f32 %v919, %v964
    %966 = vdwg.mxu0
    %967 = vmatpush.msra.mxu0 0.0
    %968 = vmatpush.msra.mxu0 0.0
    %969 = vmatpush.msra.mxu0 0.0
    %970 = vmatpush.msra.mxu0 0.0
    %971 = vmatpush.msra.mxu0 0.0
    %972 = vmatpush.msra.mxu0 0.0
    %973 = vmatpush.msra.mxu0 0.0
    %974 = vmatpush.msra.mxu0 0.0
    %975 = vmatpush.msra.mxu0 0.0
    %976 = vmatpush.msra.mxu0 0.0
    %977 = vmatpush.msra.mxu0 0.0
    %v978 = vand.u32 %v490, 4294901760
    %v979 = vsub.f32 %v490, %v978
    %980 = vmatpush.msra.mxu0 %v979
    %v981 = vand.u32 %v472, 4294901760
    %v982 = vsub.f32 %v472, %v981
    %983 = vmatpush.msra.mxu0 %v982
    %v984 = vand.u32 %v468, 4294901760
    %v985 = vsub.f32 %v468, %v984
    %986 = vmatpush.msra.mxu0 %v985
    %v987 = vand.u32 %v464, 4294901760
    %v988 = vsub.f32 %v464, %v987
    %989 = vmatpush.msra.mxu0 %v988
    %v990 = vand.u32 %v460, 4294901760
    %v991 = vsub.f32 %v460, %v990
    %992 = vmatpush.msra.mxu0 %v991
    %v993 = vand.u32 %v481, 4294901760
    %v994 = vsub.f32 %v481, %v993
    %995 = vmatmul.f32.gmra.mxu0 %v994
    %v996 = vpop.f32.mrf.mxu0
    %v997 = vadd.f32 %v965, %v996
    %998 = vdwg.mxu0
    %999 = vmatpush.msra.mxu0 0.0
    %1000 = vmatpush.msra.mxu0 0.0
    %1001 = vmatpush.msra.mxu0 0.0
    %1002 = vmatpush.msra.mxu0 0.0
    %1003 = vmatpush.msra.mxu0 0.0
    %1004 = vmatpush.msra.mxu0 0.0
    %1005 = vmatpush.msra.mxu0 0.0
    %1006 = vmatpush.msra.mxu0 0.0
    %1007 = vmatpush.msra.mxu0 0.0
    %1008 = vmatpush.msra.mxu0 0.0
    %1009 = vmatpush.msra.mxu0 0.0
    %v1010 = vand.u32 %v490, 4294901760
    %1011 = vmatpush.msra.mxu0 %v1010
    %v1012 = vand.u32 %v472, 4294901760
    %1013 = vmatpush.msra.mxu0 %v1012
    %v1014 = vand.u32 %v468, 4294901760
    %1015 = vmatpush.msra.mxu0 %v1014
    %v1016 = vand.u32 %v464, 4294901760
    %1017 = vmatpush.msra.mxu0 %v1016
    %v1018 = vand.u32 %v460, 4294901760
    %1019 = vmatpush.msra.mxu0 %v1018
    %v1020 = vand.u32 %v481, 4294901760
    %v1021 = vsub.f32 %v481, %v1020
    %v1022 = vand.u32 %v1021, 4294901760
    %1023 = vmatmul.f32.gmra.mxu0 %v1022
    %v1024 = vpop.f32.mrf.mxu0
    %v1025 = vadd.f32 %v997, %v1024
    %1026 = vdwg.mxu0
    %1027 = vmatpush.msra.mxu0 0.0
    %1028 = vmatpush.msra.mxu0 0.0
    %1029 = vmatpush.msra.mxu0 0.0
    %1030 = vmatpush.msra.mxu0 0.0
    %1031 = vmatpush.msra.mxu0 0.0
    %1032 = vmatpush.msra.mxu0 0.0
    %1033 = vmatpush.msra.mxu0 0.0
    %1034 = vmatpush.msra.mxu0 0.0
    %1035 = vmatpush.msra.mxu0 0.0
    %1036 = vmatpush.msra.mxu0 0.0
    %1037 = vmatpush.msra.mxu0 0.0
    %v1038 = vand.u32 %v490, 4294901760
    %v1039 = vsub.f32 %v490, %v1038
    %v1040 = vand.u32 %v1039, 4294901760
    %1041 = vmatpush.msra.mxu0 %v1040
    %v1042 = vand.u32 %v472, 4294901760
    %v1043 = vsub.f32 %v472, %v1042
    %v1044 = vand.u32 %v1043, 4294901760
    %1045 = vmatpush.msra.mxu0 %v1044
    %v1046 = vand.u32 %v468, 4294901760
    %v1047 = vsub.f32 %v468, %v1046
    %v1048 = vand.u32 %v1047, 4294901760
    %1049 = vmatpush.msra.mxu0 %v1048
    %v1050 = vand.u32 %v464, 4294901760
    %v1051 = vsub.f32 %v464, %v1050
    %v1052 = vand.u32 %v1051, 4294901760
    %1053 = vmatpush.msra.mxu0 %v1052
    %v1054 = vand.u32 %v460, 4294901760
    %v1055 = vsub.f32 %v460, %v1054
    %v1056 = vand.u32 %v1055, 4294901760
    %1057 = vmatpush.msra.mxu0 %v1056
    %v1058 = vand.u32 %v481, 4294901760
    %1059 = vmatmul.f32.gmra.mxu0 %v1058
    %v1060 = vpop.f32.mrf.mxu0
    %v1061 = vadd.f32 %v1025, %v1060
    %1062 = vdwg.mxu0
    %1063 = vmatpush.msra.mxu0 0.0
    %1064 = vmatpush.msra.mxu0 0.0
    %1065 = vmatpush.msra.mxu0 0.0
    %1066 = vmatpush.msra.mxu0 0.0
    %1067 = vmatpush.msra.mxu0 0.0
    %1068 = vmatpush.msra.mxu0 0.0
    %1069 = vmatpush.msra.mxu0 0.0
    %1070 = vmatpush.msra.mxu0 0.0
    %1071 = vmatpush.msra.mxu0 0.0
    %1072 = vmatpush.msra.mxu0 0.0
    %1073 = vmatpush.msra.mxu0 0.0
    %v1074 = vand.u32 %v490, 4294901760
    %1075 = vmatpush.msra.mxu0 %v1074
    %v1076 = vand.u32 %v472, 4294901760
    %1077 = vmatpush.msra.mxu0 %v1076
    %v1078 = vand.u32 %v468, 4294901760
    %1079 = vmatpush.msra.mxu0 %v1078
    %v1080 = vand.u32 %v464, 4294901760
    %1081 = vmatpush.msra.mxu0 %v1080
    %v1082 = vand.u32 %v460, 4294901760
    %1083 = vmatpush.msra.mxu0 %v1082
    %v1084 = vand.u32 %v481, 4294901760
    %1085 = vmatmul.f32.gmra.mxu0 %v1084
    %v1086 = vpop.f32.mrf.mxu0
    %v1087 = vadd.f32 %v1061, %v1086
    %1088 = vdwg.mxu0
    %1089 = vmatpush.msra.mxu0 0.0
    %1090 = vmatpush.msra.mxu0 0.0
    %1091 = vmatpush.msra.mxu0 0.0
    %1092 = vmatpush.msra.mxu0 0.0
    %1093 = vmatpush.msra.mxu0 0.0
    %1094 = vmatpush.msra.mxu0 0.0
    %1095 = vmatpush.msra.mxu0 0.0
    %1096 = vmatpush.msra.mxu0 0.0
    %1097 = vmatpush.msra.mxu0 0.0
    %1098 = vmatpush.msra.mxu0 0.0
    %1099 = vmatpush.msra.mxu0 0.0
    %v1100 = vand.u32 %v493, 4294901760
    %1101 = vmatpush.msra.mxu0 %v1100
    %v1102 = vand.u32 %v473, 4294901760
    %1103 = vmatpush.msra.mxu0 %v1102
    %v1104 = vand.u32 %v469, 4294901760
    %1105 = vmatpush.msra.mxu0 %v1104
    %v1106 = vand.u32 %v465, 4294901760
    %1107 = vmatpush.msra.mxu0 %v1106
    %v1108 = vand.u32 %v461, 4294901760
    %1109 = vmatpush.msra.mxu0 %v1108
    %v1110 = vand.u32 %v481, 4294901760
    %v1111 = vsub.f32 %v481, %v1110
    %v1112 = vand.u32 %v1111, 4294901760
    %v1113 = vsub.f32 %v1111, %v1112
    %v1114 = vand.u32 %v1113, 4294901760
    %1115 = vmatmul.f32.gmra.mxu0 %v1114
    %v1116 = vpop.f32.mrf.mxu0
    %v1117 = vadd.f32 %v477, %v1116
    %1118 = vdwg.mxu0
    %1119 = vmatpush.msra.mxu0 0.0
    %1120 = vmatpush.msra.mxu0 0.0
    %1121 = vmatpush.msra.mxu0 0.0
    %1122 = vmatpush.msra.mxu0 0.0
    %1123 = vmatpush.msra.mxu0 0.0
    %1124 = vmatpush.msra.mxu0 0.0
    %1125 = vmatpush.msra.mxu0 0.0
    %1126 = vmatpush.msra.mxu0 0.0
    %1127 = vmatpush.msra.mxu0 0.0
    %1128 = vmatpush.msra.mxu0 0.0
    %1129 = vmatpush.msra.mxu0 0.0
    %v1130 = vand.u32 %v493, 4294901760
    %v1131 = vsub.f32 %v493, %v1130
    %v1132 = vand.u32 %v1131, 4294901760
    %v1133 = vsub.f32 %v1131, %v1132
    %v1134 = vand.u32 %v1133, 4294901760
    %1135 = vmatpush.msra.mxu0 %v1134
    %v1136 = vand.u32 %v473, 4294901760
    %v1137 = vsub.f32 %v473, %v1136
    %v1138 = vand.u32 %v1137, 4294901760
    %v1139 = vsub.f32 %v1137, %v1138
    %v1140 = vand.u32 %v1139, 4294901760
    %1141 = vmatpush.msra.mxu0 %v1140
    %v1142 = vand.u32 %v469, 4294901760
    %v1143 = vsub.f32 %v469, %v1142
    %v1144 = vand.u32 %v1143, 4294901760
    %v1145 = vsub.f32 %v1143, %v1144
    %v1146 = vand.u32 %v1145, 4294901760
    %1147 = vmatpush.msra.mxu0 %v1146
    %v1148 = vand.u32 %v465, 4294901760
    %v1149 = vsub.f32 %v465, %v1148
    %v1150 = vand.u32 %v1149, 4294901760
    %v1151 = vsub.f32 %v1149, %v1150
    %v1152 = vand.u32 %v1151, 4294901760
    %1153 = vmatpush.msra.mxu0 %v1152
    %v1154 = vand.u32 %v461, 4294901760
    %v1155 = vsub.f32 %v461, %v1154
    %v1156 = vand.u32 %v1155, 4294901760
    %v1157 = vsub.f32 %v1155, %v1156
    %v1158 = vand.u32 %v1157, 4294901760
    %1159 = vmatpush.msra.mxu0 %v1158
    %v1160 = vand.u32 %v481, 4294901760
    %1161 = vmatmul.f32.gmra.mxu0 %v1160
    %v1162 = vpop.f32.mrf.mxu0
    %v1163 = vadd.f32 %v1117, %v1162
    %1164 = vdwg.mxu0
    %1165 = vmatpush.msra.mxu0 0.0
    %1166 = vmatpush.msra.mxu0 0.0
    %1167 = vmatpush.msra.mxu0 0.0
    %1168 = vmatpush.msra.mxu0 0.0
    %1169 = vmatpush.msra.mxu0 0.0
    %1170 = vmatpush.msra.mxu0 0.0
    %1171 = vmatpush.msra.mxu0 0.0
    %1172 = vmatpush.msra.mxu0 0.0
    %1173 = vmatpush.msra.mxu0 0.0
    %1174 = vmatpush.msra.mxu0 0.0
    %1175 = vmatpush.msra.mxu0 0.0
    %v1176 = vand.u32 %v493, 4294901760
    %v1177 = vsub.f32 %v493, %v1176
    %1178 = vmatpush.msra.mxu0 %v1177
    %v1179 = vand.u32 %v473, 4294901760
    %v1180 = vsub.f32 %v473, %v1179
    %1181 = vmatpush.msra.mxu0 %v1180
    %v1182 = vand.u32 %v469, 4294901760
    %v1183 = vsub.f32 %v469, %v1182
    %1184 = vmatpush.msra.mxu0 %v1183
    %v1185 = vand.u32 %v465, 4294901760
    %v1186 = vsub.f32 %v465, %v1185
    %1187 = vmatpush.msra.mxu0 %v1186
    %v1188 = vand.u32 %v461, 4294901760
    %v1189 = vsub.f32 %v461, %v1188
    %1190 = vmatpush.msra.mxu0 %v1189
    %v1191 = vand.u32 %v481, 4294901760
    %v1192 = vsub.f32 %v481, %v1191
    %1193 = vmatmul.f32.gmra.mxu0 %v1192
    %v1194 = vpop.f32.mrf.mxu0
    %v1195 = vadd.f32 %v1163, %v1194
    %1196 = vdwg.mxu0
    %1197 = vmatpush.msra.mxu0 0.0
    %1198 = vmatpush.msra.mxu0 0.0
    %1199 = vmatpush.msra.mxu0 0.0
    %1200 = vmatpush.msra.mxu0 0.0
    %1201 = vmatpush.msra.mxu0 0.0
    %1202 = vmatpush.msra.mxu0 0.0
    %1203 = vmatpush.msra.mxu0 0.0
    %1204 = vmatpush.msra.mxu0 0.0
    %1205 = vmatpush.msra.mxu0 0.0
    %1206 = vmatpush.msra.mxu0 0.0
    %1207 = vmatpush.msra.mxu0 0.0
    %v1208 = vand.u32 %v493, 4294901760
    %1209 = vmatpush.msra.mxu0 %v1208
    %v1210 = vand.u32 %v473, 4294901760
    %1211 = vmatpush.msra.mxu0 %v1210
    %v1212 = vand.u32 %v469, 4294901760
    %1213 = vmatpush.msra.mxu0 %v1212
    %v1214 = vand.u32 %v465, 4294901760
    %1215 = vmatpush.msra.mxu0 %v1214
    %v1216 = vand.u32 %v461, 4294901760
    %1217 = vmatpush.msra.mxu0 %v1216
    %v1218 = vand.u32 %v481, 4294901760
    %v1219 = vsub.f32 %v481, %v1218
    %v1220 = vand.u32 %v1219, 4294901760
    %1221 = vmatmul.f32.gmra.mxu0 %v1220
    %v1222 = vpop.f32.mrf.mxu0
    %v1223 = vadd.f32 %v1195, %v1222
    %1224 = vdwg.mxu0
    %1225 = vmatpush.msra.mxu0 0.0
    %1226 = vmatpush.msra.mxu0 0.0
    %1227 = vmatpush.msra.mxu0 0.0
    %1228 = vmatpush.msra.mxu0 0.0
    %1229 = vmatpush.msra.mxu0 0.0
    %1230 = vmatpush.msra.mxu0 0.0
    %1231 = vmatpush.msra.mxu0 0.0
    %1232 = vmatpush.msra.mxu0 0.0
    %1233 = vmatpush.msra.mxu0 0.0
    %1234 = vmatpush.msra.mxu0 0.0
    %1235 = vmatpush.msra.mxu0 0.0
    %v1236 = vand.u32 %v493, 4294901760
    %v1237 = vsub.f32 %v493, %v1236
    %v1238 = vand.u32 %v1237, 4294901760
    %1239 = vmatpush.msra.mxu0 %v1238
    %v1240 = vand.u32 %v473, 4294901760
    %v1241 = vsub.f32 %v473, %v1240
    %v1242 = vand.u32 %v1241, 4294901760
    %1243 = vmatpush.msra.mxu0 %v1242
    %v1244 = vand.u32 %v469, 4294901760
    %v1245 = vsub.f32 %v469, %v1244
    %v1246 = vand.u32 %v1245, 4294901760
    %1247 = vmatpush.msra.mxu0 %v1246
    %v1248 = vand.u32 %v465, 4294901760
    %v1249 = vsub.f32 %v465, %v1248
    %v1250 = vand.u32 %v1249, 4294901760
    %1251 = vmatpush.msra.mxu0 %v1250
    %v1252 = vand.u32 %v461, 4294901760
    %v1253 = vsub.f32 %v461, %v1252
    %v1254 = vand.u32 %v1253, 4294901760
    %1255 = vmatpush.msra.mxu0 %v1254
    %v1256 = vand.u32 %v481, 4294901760
    %1257 = vmatmul.f32.gmra.mxu0 %v1256
    %v1258 = vpop.f32.mrf.mxu0
    %v1259 = vadd.f32 %v1223, %v1258
    %1260 = vdwg.mxu0
    %1261 = vmatpush.msra.mxu0 0.0
    %1262 = vmatpush.msra.mxu0 0.0
    %1263 = vmatpush.msra.mxu0 0.0
    %1264 = vmatpush.msra.mxu0 0.0
    %1265 = vmatpush.msra.mxu0 0.0
    %1266 = vmatpush.msra.mxu0 0.0
    %1267 = vmatpush.msra.mxu0 0.0
    %1268 = vmatpush.msra.mxu0 0.0
    %1269 = vmatpush.msra.mxu0 0.0
    %1270 = vmatpush.msra.mxu0 0.0
    %1271 = vmatpush.msra.mxu0 0.0
    %v1272 = vand.u32 %v493, 4294901760
    %1273 = vmatpush.msra.mxu0 %v1272
    %v1274 = vand.u32 %v473, 4294901760
    %1275 = vmatpush.msra.mxu0 %v1274
    %v1276 = vand.u32 %v469, 4294901760
    %1277 = vmatpush.msra.mxu0 %v1276
    %v1278 = vand.u32 %v465, 4294901760
    %1279 = vmatpush.msra.mxu0 %v1278
    %v1280 = vand.u32 %v461, 4294901760
    %1281 = vmatpush.msra.mxu0 %v1280
    %v1282 = vand.u32 %v481, 4294901760
    %1283 = vmatmul.f32.gmra.mxu0 %v1282
    %v1284 = vpop.f32.mrf.mxu0
    %v1285 = vadd.f32 %v1259, %v1284
    %1286 = vdwg.mxu0
    %v1287 = vmax.f32 %v691, 0.0
    %v1288 = vmax.f32 %v889, 0.0
    %v1289 = vmax.f32 %v1087, 0.0
    %v1290 = vmax.f32 %v1285, 0.0
    %1291 = vrot.lane.b32.xlu0 %v1287, 17
    %v1292 = vpop.permute.xlu0 %1291
    %1293 = vrot.lane.b32.xlu0 %v1288, 17
    %v1294 = vpop.permute.xlu0 %1293
    %1295 = vrot.lane.b32.xlu0 %v1289, 17
    %v1296 = vpop.permute.xlu0 %1295
    %1297 = vrot.lane.b32.xlu0 %v1290, 17
    %v1298 = vpop.permute.xlu0 %1297
    %v1299 = vsel %vm144, %v1296, %v1298
    %v1300 = vsel %vm144, %v1294, %v1296
    %v1301 = vsel %vm144, %v1292, %v1294
    %v1302 = vsel %vm144, %v1298, %v1292
    %v1303 = vmul.f32 %v1302, %v149
    %v1304 = vmul.f32 %v1301, %v150
    %v1305 = vmul.f32 %v1300, %v151
    %v1306 = vmul.f32 %v1299, %v152
    %1307 = vrot.lane.b32.xlu0 %v1287, 16
    %v1308 = vpop.permute.xlu0 %1307
    %1309 = vrot.lane.b32.xlu0 %v1288, 16
    %v1310 = vpop.permute.xlu0 %1309
    %1311 = vrot.lane.b32.xlu0 %v1289, 16
    %v1312 = vpop.permute.xlu0 %1311
    %1313 = vrot.lane.b32.xlu0 %v1290, 16
    %v1314 = vpop.permute.xlu0 %1313
    %v1315 = vsel %vm176, %v1312, %v1314
    %v1316 = vsel %vm176, %v1310, %v1312
    %v1317 = vsel %vm176, %v1308, %v1310
    %v1318 = vsel %vm176, %v1314, %v1308
    %v1319 = vmul.f32 %v1318, %v181
    %v1320 = vmul.f32 %v1317, %v182
    %v1321 = vmul.f32 %v1316, %v183
    %v1322 = vmul.f32 %v1315, %v184
    %1323 = vrot.lane.b32.xlu0 %v1287, 15
    %v1324 = vpop.permute.xlu0 %1323
    %1325 = vrot.lane.b32.xlu0 %v1288, 15
    %v1326 = vpop.permute.xlu0 %1325
    %1327 = vrot.lane.b32.xlu0 %v1289, 15
    %v1328 = vpop.permute.xlu0 %1327
    %1329 = vrot.lane.b32.xlu0 %v1290, 15
    %v1330 = vpop.permute.xlu0 %1329
    %v1331 = vsel %vm208, %v1328, %v1330
    %v1332 = vsel %vm208, %v1326, %v1328
    %v1333 = vsel %vm208, %v1324, %v1326
    %v1334 = vsel %vm208, %v1330, %v1324
    %v1335 = vmul.f32 %v1334, %v213
    %v1336 = vmul.f32 %v1333, %v214
    %v1337 = vmul.f32 %v1332, %v215
    %v1338 = vmul.f32 %v1331, %v216
    %1339 = vrot.lane.b32.xlu0 %v1287, 1
    %v1340 = vpop.permute.xlu0 %1339
    %1341 = vrot.lane.b32.xlu0 %v1288, 1
    %v1342 = vpop.permute.xlu0 %1341
    %1343 = vrot.lane.b32.xlu0 %v1289, 1
    %v1344 = vpop.permute.xlu0 %1343
    %1345 = vrot.lane.b32.xlu0 %v1290, 1
    %v1346 = vpop.permute.xlu0 %1345
    %v1347 = vsel %vm240, %v1344, %v1346
    %v1348 = vsel %vm240, %v1342, %v1344
    %v1349 = vsel %vm240, %v1340, %v1342
    %v1350 = vsel %vm240, %v1346, %v1340
    %v1351 = vmul.f32 %v1350, %v245
    %v1352 = vmul.f32 %v1349, %v246
    %v1353 = vmul.f32 %v1348, %v247
    %v1354 = vmul.f32 %v1347, %v248
    %v1355 = vmul.f32 %v1287, %v253
    %v1356 = vmul.f32 %v1288, %v254
    %v1357 = vmul.f32 %v1289, %v255
    %v1358 = vmul.f32 %v1290, %v256
    %1359 = vrot.lane.b32.xlu0 %v1287, 127
    %v1360 = vpop.permute.xlu0 %1359
    %1361 = vrot.lane.b32.xlu0 %v1288, 127
    %v1362 = vpop.permute.xlu0 %1361
    %1363 = vrot.lane.b32.xlu0 %v1289, 127
    %v1364 = vpop.permute.xlu0 %1363
    %1365 = vrot.lane.b32.xlu0 %v1290, 127
    %v1366 = vpop.permute.xlu0 %1365
    %v1367 = vsel %vm288, %v1364, %v1366
    %v1368 = vsel %vm288, %v1362, %v1364
    %v1369 = vsel %vm288, %v1360, %v1362
    %v1370 = vsel %vm288, %v1366, %v1360
    %v1371 = vmul.f32 %v1369, %v293
    %v1372 = vmul.f32 %v1368, %v294
    %v1373 = vmul.f32 %v1367, %v295
    %v1374 = vmul.f32 %v1370, %v296
    %1375 = vrot.lane.b32.xlu0 %v1287, 113
    %v1376 = vpop.permute.xlu0 %1375
    %1377 = vrot.lane.b32.xlu0 %v1288, 113
    %v1378 = vpop.permute.xlu0 %1377
    %1379 = vrot.lane.b32.xlu0 %v1289, 113
    %v1380 = vpop.permute.xlu0 %1379
    %1381 = vrot.lane.b32.xlu0 %v1290, 113
    %v1382 = vpop.permute.xlu0 %1381
    %v1383 = vsel %vm320, %v1380, %v1382
    %v1384 = vsel %vm320, %v1378, %v1380
    %v1385 = vsel %vm320, %v1376, %v1378
    %v1386 = vsel %vm320, %v1382, %v1376
    %v1387 = vmul.f32 %v1385, %v325
    %v1388 = vmul.f32 %v1384, %v326
    %v1389 = vmul.f32 %v1383, %v327
    %v1390 = vmul.f32 %v1386, %v328
    %1391 = vrot.lane.b32.xlu0 %v1287, 112
    %v1392 = vpop.permute.xlu0 %1391
    %1393 = vrot.lane.b32.xlu0 %v1288, 112
    %v1394 = vpop.permute.xlu0 %1393
    %1395 = vrot.lane.b32.xlu0 %v1289, 112
    %v1396 = vpop.permute.xlu0 %1395
    %1397 = vrot.lane.b32.xlu0 %v1290, 112
    %v1398 = vpop.permute.xlu0 %1397
    %v1399 = vsel %vm352, %v1396, %v1398
    %v1400 = vsel %vm352, %v1394, %v1396
    %v1401 = vsel %vm352, %v1392, %v1394
    %v1402 = vsel %vm352, %v1398, %v1392
    %v1403 = vmul.f32 %v1401, %v357
    %v1404 = vmul.f32 %v1400, %v358
    %v1405 = vmul.f32 %v1399, %v359
    %v1406 = vmul.f32 %v1402, %v360
    %1407 = vrot.lane.b32.xlu0 %v1287, 111
    %v1408 = vpop.permute.xlu0 %1407
    %1409 = vrot.lane.b32.xlu0 %v1288, 111
    %v1410 = vpop.permute.xlu0 %1409
    %1411 = vrot.lane.b32.xlu0 %v1289, 111
    %v1412 = vpop.permute.xlu0 %1411
    %1413 = vrot.lane.b32.xlu0 %v1290, 111
    %v1414 = vpop.permute.xlu0 %1413
    %v1415 = vsel %vm384, %v1412, %v1414
    %v1416 = vsel %vm384, %v1410, %v1412
    %v1417 = vsel %vm384, %v1408, %v1410
    %v1418 = vsel %vm384, %v1414, %v1408
    %v1419 = vmul.f32 %v1417, %v389
    %v1420 = vmul.f32 %v1416, %v390
    %v1421 = vmul.f32 %v1415, %v391
    %v1422 = vmul.f32 %v1418, %v392
    %v1427 = vrot.slane %v1319, 4
    %v1428 = vrot.slane %v1320, 4
    %v1429 = vrot.slane %v1321, 4
    %v1430 = vrot.slane %v1322, 4
    %v1439 = vrot.slane %v1351, 4
    %v1440 = vrot.slane %v1352, 4
    %v1441 = vrot.slane %v1353, 4
    %v1442 = vrot.slane %v1354, 4
    %v1451 = vrot.slane %v1371, 4
    %v1452 = vrot.slane %v1372, 4
    %v1453 = vrot.slane %v1373, 4
    %v1454 = vrot.slane %v1374, 4
    %v1463 = vrot.slane %v1403, 4
    %v1464 = vrot.slane %v1404, 4
    %v1465 = vrot.slane %v1405, 4
    %v1466 = vrot.slane %v1406, 4
    %v1471 = vsel %vm103, %v1303, %v1427
    %v1472 = vsel %vm103, %v1304, %v1428
    %v1473 = vsel %vm103, %v1305, %v1429
    %v1474 = vsel %vm103, %v1306, %v1430
    %v1475 = vsel %vm103, %v1335, %v1439
    %v1476 = vsel %vm103, %v1336, %v1440
    %v1477 = vsel %vm103, %v1337, %v1441
    %v1478 = vsel %vm103, %v1338, %v1442
    %v1479 = vsel %vm103, %v1355, %v1451
    %v1480 = vsel %vm103, %v1356, %v1452
    %v1481 = vsel %vm103, %v1357, %v1453
    %v1482 = vsel %vm103, %v1358, %v1454
    %v1483 = vsel %vm103, %v1387, %v1463
    %v1484 = vsel %vm103, %v1388, %v1464
    %v1485 = vsel %vm103, %v1389, %v1465
    %v1486 = vsel %vm103, %v1390, %v1466
    %1487 = vset.pattern.permute.xlu0 1
    %1488 = vperm.xlu0 %1487, %v120
    %v1489 = vpop.permute.xlu0 %1488
    %v1492 = vsel %vm479, %v119, 0
    %v1495 = vsel %vm103, %v1419, 0
    %v1498 = vsel %vm103, %v1420, 0
    %v1501 = vsel %vm103, %v1421, 0
    %v1504 = vsel %vm103, %v1422, 0
    %1506 = vmatpush.msra.mxu0 0.0
    %1507 = vmatpush.msra.mxu0 0.0
    %1508 = vmatpush.msra.mxu0 0.0
    %1509 = vmatpush.msra.mxu0 0.0
    %1510 = vmatpush.msra.mxu0 0.0
    %1511 = vmatpush.msra.mxu0 0.0
    %1512 = vmatpush.msra.mxu0 0.0
    %1513 = vmatpush.msra.mxu0 0.0
    %1514 = vmatpush.msra.mxu0 0.0
    %1515 = vmatpush.msra.mxu0 0.0
    %1516 = vmatpush.msra.mxu0 0.0
    %v1517 = vand.u32 %v1495, 4294901760
    %1518 = vmatpush.msra.mxu0 %v1517
    %v1519 = vand.u32 %v1483, 4294901760
    %1520 = vmatpush.msra.mxu0 %v1519
    %v1521 = vand.u32 %v1479, 4294901760
    %1522 = vmatpush.msra.mxu0 %v1521
    %v1523 = vand.u32 %v1475, 4294901760
    %1524 = vmatpush.msra.mxu0 %v1523
    %v1525 = vand.u32 %v1471, 4294901760
    %1526 = vmatpush.msra.mxu0 %v1525
    %v1527 = vand.u32 %v1492, 4294901760
    %v1528 = vsub.f32 %v1492, %v1527
    %v1529 = vand.u32 %v1528, 4294901760
    %v1530 = vsub.f32 %v1528, %v1529
    %v1531 = vand.u32 %v1530, 4294901760
    %1532 = vmatmul.f32.gmra.mxu0 %v1531
    %v1533 = vpop.f32.mrf.mxu0
    %v1534 = vadd.f32 %v1489, %v1533
    %1535 = vdwg.mxu0
    %1536 = vmatpush.msra.mxu0 0.0
    %1537 = vmatpush.msra.mxu0 0.0
    %1538 = vmatpush.msra.mxu0 0.0
    %1539 = vmatpush.msra.mxu0 0.0
    %1540 = vmatpush.msra.mxu0 0.0
    %1541 = vmatpush.msra.mxu0 0.0
    %1542 = vmatpush.msra.mxu0 0.0
    %1543 = vmatpush.msra.mxu0 0.0
    %1544 = vmatpush.msra.mxu0 0.0
    %1545 = vmatpush.msra.mxu0 0.0
    %1546 = vmatpush.msra.mxu0 0.0
    %v1547 = vand.u32 %v1495, 4294901760
    %v1548 = vsub.f32 %v1495, %v1547
    %v1549 = vand.u32 %v1548, 4294901760
    %v1550 = vsub.f32 %v1548, %v1549
    %v1551 = vand.u32 %v1550, 4294901760
    %1552 = vmatpush.msra.mxu0 %v1551
    %v1553 = vand.u32 %v1483, 4294901760
    %v1554 = vsub.f32 %v1483, %v1553
    %v1555 = vand.u32 %v1554, 4294901760
    %v1556 = vsub.f32 %v1554, %v1555
    %v1557 = vand.u32 %v1556, 4294901760
    %1558 = vmatpush.msra.mxu0 %v1557
    %v1559 = vand.u32 %v1479, 4294901760
    %v1560 = vsub.f32 %v1479, %v1559
    %v1561 = vand.u32 %v1560, 4294901760
    %v1562 = vsub.f32 %v1560, %v1561
    %v1563 = vand.u32 %v1562, 4294901760
    %1564 = vmatpush.msra.mxu0 %v1563
    %v1565 = vand.u32 %v1475, 4294901760
    %v1566 = vsub.f32 %v1475, %v1565
    %v1567 = vand.u32 %v1566, 4294901760
    %v1568 = vsub.f32 %v1566, %v1567
    %v1569 = vand.u32 %v1568, 4294901760
    %1570 = vmatpush.msra.mxu0 %v1569
    %v1571 = vand.u32 %v1471, 4294901760
    %v1572 = vsub.f32 %v1471, %v1571
    %v1573 = vand.u32 %v1572, 4294901760
    %v1574 = vsub.f32 %v1572, %v1573
    %v1575 = vand.u32 %v1574, 4294901760
    %1576 = vmatpush.msra.mxu0 %v1575
    %v1577 = vand.u32 %v1492, 4294901760
    %1578 = vmatmul.f32.gmra.mxu0 %v1577
    %v1579 = vpop.f32.mrf.mxu0
    %v1580 = vadd.f32 %v1534, %v1579
    %1581 = vdwg.mxu0
    %1582 = vmatpush.msra.mxu0 0.0
    %1583 = vmatpush.msra.mxu0 0.0
    %1584 = vmatpush.msra.mxu0 0.0
    %1585 = vmatpush.msra.mxu0 0.0
    %1586 = vmatpush.msra.mxu0 0.0
    %1587 = vmatpush.msra.mxu0 0.0
    %1588 = vmatpush.msra.mxu0 0.0
    %1589 = vmatpush.msra.mxu0 0.0
    %1590 = vmatpush.msra.mxu0 0.0
    %1591 = vmatpush.msra.mxu0 0.0
    %1592 = vmatpush.msra.mxu0 0.0
    %v1593 = vand.u32 %v1495, 4294901760
    %v1594 = vsub.f32 %v1495, %v1593
    %1595 = vmatpush.msra.mxu0 %v1594
    %v1596 = vand.u32 %v1483, 4294901760
    %v1597 = vsub.f32 %v1483, %v1596
    %1598 = vmatpush.msra.mxu0 %v1597
    %v1599 = vand.u32 %v1479, 4294901760
    %v1600 = vsub.f32 %v1479, %v1599
    %1601 = vmatpush.msra.mxu0 %v1600
    %v1602 = vand.u32 %v1475, 4294901760
    %v1603 = vsub.f32 %v1475, %v1602
    %1604 = vmatpush.msra.mxu0 %v1603
    %v1605 = vand.u32 %v1471, 4294901760
    %v1606 = vsub.f32 %v1471, %v1605
    %1607 = vmatpush.msra.mxu0 %v1606
    %v1608 = vand.u32 %v1492, 4294901760
    %v1609 = vsub.f32 %v1492, %v1608
    %1610 = vmatmul.f32.gmra.mxu0 %v1609
    %v1611 = vpop.f32.mrf.mxu0
    %v1612 = vadd.f32 %v1580, %v1611
    %1613 = vdwg.mxu0
    %1614 = vmatpush.msra.mxu0 0.0
    %1615 = vmatpush.msra.mxu0 0.0
    %1616 = vmatpush.msra.mxu0 0.0
    %1617 = vmatpush.msra.mxu0 0.0
    %1618 = vmatpush.msra.mxu0 0.0
    %1619 = vmatpush.msra.mxu0 0.0
    %1620 = vmatpush.msra.mxu0 0.0
    %1621 = vmatpush.msra.mxu0 0.0
    %1622 = vmatpush.msra.mxu0 0.0
    %1623 = vmatpush.msra.mxu0 0.0
    %1624 = vmatpush.msra.mxu0 0.0
    %v1625 = vand.u32 %v1495, 4294901760
    %1626 = vmatpush.msra.mxu0 %v1625
    %v1627 = vand.u32 %v1483, 4294901760
    %1628 = vmatpush.msra.mxu0 %v1627
    %v1629 = vand.u32 %v1479, 4294901760
    %1630 = vmatpush.msra.mxu0 %v1629
    %v1631 = vand.u32 %v1475, 4294901760
    %1632 = vmatpush.msra.mxu0 %v1631
    %v1633 = vand.u32 %v1471, 4294901760
    %1634 = vmatpush.msra.mxu0 %v1633
    %v1635 = vand.u32 %v1492, 4294901760
    %v1636 = vsub.f32 %v1492, %v1635
    %v1637 = vand.u32 %v1636, 4294901760
    %1638 = vmatmul.f32.gmra.mxu0 %v1637
    %v1639 = vpop.f32.mrf.mxu0
    %v1640 = vadd.f32 %v1612, %v1639
    %1641 = vdwg.mxu0
    %1642 = vmatpush.msra.mxu0 0.0
    %1643 = vmatpush.msra.mxu0 0.0
    %1644 = vmatpush.msra.mxu0 0.0
    %1645 = vmatpush.msra.mxu0 0.0
    %1646 = vmatpush.msra.mxu0 0.0
    %1647 = vmatpush.msra.mxu0 0.0
    %1648 = vmatpush.msra.mxu0 0.0
    %1649 = vmatpush.msra.mxu0 0.0
    %1650 = vmatpush.msra.mxu0 0.0
    %1651 = vmatpush.msra.mxu0 0.0
    %1652 = vmatpush.msra.mxu0 0.0
    %v1653 = vand.u32 %v1495, 4294901760
    %v1654 = vsub.f32 %v1495, %v1653
    %v1655 = vand.u32 %v1654, 4294901760
    %1656 = vmatpush.msra.mxu0 %v1655
    %v1657 = vand.u32 %v1483, 4294901760
    %v1658 = vsub.f32 %v1483, %v1657
    %v1659 = vand.u32 %v1658, 4294901760
    %1660 = vmatpush.msra.mxu0 %v1659
    %v1661 = vand.u32 %v1479, 4294901760
    %v1662 = vsub.f32 %v1479, %v1661
    %v1663 = vand.u32 %v1662, 4294901760
    %1664 = vmatpush.msra.mxu0 %v1663
    %v1665 = vand.u32 %v1475, 4294901760
    %v1666 = vsub.f32 %v1475, %v1665
    %v1667 = vand.u32 %v1666, 4294901760
    %1668 = vmatpush.msra.mxu0 %v1667
    %v1669 = vand.u32 %v1471, 4294901760
    %v1670 = vsub.f32 %v1471, %v1669
    %v1671 = vand.u32 %v1670, 4294901760
    %1672 = vmatpush.msra.mxu0 %v1671
    %v1673 = vand.u32 %v1492, 4294901760
    %1674 = vmatmul.f32.gmra.mxu0 %v1673
    %v1675 = vpop.f32.mrf.mxu0
    %v1676 = vadd.f32 %v1640, %v1675
    %1677 = vdwg.mxu0
    %1678 = vmatpush.msra.mxu0 0.0
    %1679 = vmatpush.msra.mxu0 0.0
    %1680 = vmatpush.msra.mxu0 0.0
    %1681 = vmatpush.msra.mxu0 0.0
    %1682 = vmatpush.msra.mxu0 0.0
    %1683 = vmatpush.msra.mxu0 0.0
    %1684 = vmatpush.msra.mxu0 0.0
    %1685 = vmatpush.msra.mxu0 0.0
    %1686 = vmatpush.msra.mxu0 0.0
    %1687 = vmatpush.msra.mxu0 0.0
    %1688 = vmatpush.msra.mxu0 0.0
    %v1689 = vand.u32 %v1495, 4294901760
    %1690 = vmatpush.msra.mxu0 %v1689
    %v1691 = vand.u32 %v1483, 4294901760
    %1692 = vmatpush.msra.mxu0 %v1691
    %v1693 = vand.u32 %v1479, 4294901760
    %1694 = vmatpush.msra.mxu0 %v1693
    %v1695 = vand.u32 %v1475, 4294901760
    %1696 = vmatpush.msra.mxu0 %v1695
    %v1697 = vand.u32 %v1471, 4294901760
    %1698 = vmatpush.msra.mxu0 %v1697
    %v1699 = vand.u32 %v1492, 4294901760
    %1700 = vmatmul.f32.gmra.mxu0 %v1699
    %v1701 = vpop.f32.mrf.mxu0
    %v1702 = vadd.f32 %v1676, %v1701
    %1703 = vdwg.mxu0
    %1704 = vmatpush.msra.mxu0 0.0
    %1705 = vmatpush.msra.mxu0 0.0
    %1706 = vmatpush.msra.mxu0 0.0
    %1707 = vmatpush.msra.mxu0 0.0
    %1708 = vmatpush.msra.mxu0 0.0
    %1709 = vmatpush.msra.mxu0 0.0
    %1710 = vmatpush.msra.mxu0 0.0
    %1711 = vmatpush.msra.mxu0 0.0
    %1712 = vmatpush.msra.mxu0 0.0
    %1713 = vmatpush.msra.mxu0 0.0
    %1714 = vmatpush.msra.mxu0 0.0
    %v1715 = vand.u32 %v1498, 4294901760
    %1716 = vmatpush.msra.mxu0 %v1715
    %v1717 = vand.u32 %v1484, 4294901760
    %1718 = vmatpush.msra.mxu0 %v1717
    %v1719 = vand.u32 %v1480, 4294901760
    %1720 = vmatpush.msra.mxu0 %v1719
    %v1721 = vand.u32 %v1476, 4294901760
    %1722 = vmatpush.msra.mxu0 %v1721
    %v1723 = vand.u32 %v1472, 4294901760
    %1724 = vmatpush.msra.mxu0 %v1723
    %v1725 = vand.u32 %v1492, 4294901760
    %v1726 = vsub.f32 %v1492, %v1725
    %v1727 = vand.u32 %v1726, 4294901760
    %v1728 = vsub.f32 %v1726, %v1727
    %v1729 = vand.u32 %v1728, 4294901760
    %1730 = vmatmul.f32.gmra.mxu0 %v1729
    %v1731 = vpop.f32.mrf.mxu0
    %v1732 = vadd.f32 %v1489, %v1731
    %1733 = vdwg.mxu0
    %1734 = vmatpush.msra.mxu0 0.0
    %1735 = vmatpush.msra.mxu0 0.0
    %1736 = vmatpush.msra.mxu0 0.0
    %1737 = vmatpush.msra.mxu0 0.0
    %1738 = vmatpush.msra.mxu0 0.0
    %1739 = vmatpush.msra.mxu0 0.0
    %1740 = vmatpush.msra.mxu0 0.0
    %1741 = vmatpush.msra.mxu0 0.0
    %1742 = vmatpush.msra.mxu0 0.0
    %1743 = vmatpush.msra.mxu0 0.0
    %1744 = vmatpush.msra.mxu0 0.0
    %v1745 = vand.u32 %v1498, 4294901760
    %v1746 = vsub.f32 %v1498, %v1745
    %v1747 = vand.u32 %v1746, 4294901760
    %v1748 = vsub.f32 %v1746, %v1747
    %v1749 = vand.u32 %v1748, 4294901760
    %1750 = vmatpush.msra.mxu0 %v1749
    %v1751 = vand.u32 %v1484, 4294901760
    %v1752 = vsub.f32 %v1484, %v1751
    %v1753 = vand.u32 %v1752, 4294901760
    %v1754 = vsub.f32 %v1752, %v1753
    %v1755 = vand.u32 %v1754, 4294901760
    %1756 = vmatpush.msra.mxu0 %v1755
    %v1757 = vand.u32 %v1480, 4294901760
    %v1758 = vsub.f32 %v1480, %v1757
    %v1759 = vand.u32 %v1758, 4294901760
    %v1760 = vsub.f32 %v1758, %v1759
    %v1761 = vand.u32 %v1760, 4294901760
    %1762 = vmatpush.msra.mxu0 %v1761
    %v1763 = vand.u32 %v1476, 4294901760
    %v1764 = vsub.f32 %v1476, %v1763
    %v1765 = vand.u32 %v1764, 4294901760
    %v1766 = vsub.f32 %v1764, %v1765
    %v1767 = vand.u32 %v1766, 4294901760
    %1768 = vmatpush.msra.mxu0 %v1767
    %v1769 = vand.u32 %v1472, 4294901760
    %v1770 = vsub.f32 %v1472, %v1769
    %v1771 = vand.u32 %v1770, 4294901760
    %v1772 = vsub.f32 %v1770, %v1771
    %v1773 = vand.u32 %v1772, 4294901760
    %1774 = vmatpush.msra.mxu0 %v1773
    %v1775 = vand.u32 %v1492, 4294901760
    %1776 = vmatmul.f32.gmra.mxu0 %v1775
    %v1777 = vpop.f32.mrf.mxu0
    %v1778 = vadd.f32 %v1732, %v1777
    %1779 = vdwg.mxu0
    %1780 = vmatpush.msra.mxu0 0.0
    %1781 = vmatpush.msra.mxu0 0.0
    %1782 = vmatpush.msra.mxu0 0.0
    %1783 = vmatpush.msra.mxu0 0.0
    %1784 = vmatpush.msra.mxu0 0.0
    %1785 = vmatpush.msra.mxu0 0.0
    %1786 = vmatpush.msra.mxu0 0.0
    %1787 = vmatpush.msra.mxu0 0.0
    %1788 = vmatpush.msra.mxu0 0.0
    %1789 = vmatpush.msra.mxu0 0.0
    %1790 = vmatpush.msra.mxu0 0.0
    %v1791 = vand.u32 %v1498, 4294901760
    %v1792 = vsub.f32 %v1498, %v1791
    %1793 = vmatpush.msra.mxu0 %v1792
    %v1794 = vand.u32 %v1484, 4294901760
    %v1795 = vsub.f32 %v1484, %v1794
    %1796 = vmatpush.msra.mxu0 %v1795
    %v1797 = vand.u32 %v1480, 4294901760
    %v1798 = vsub.f32 %v1480, %v1797
    %1799 = vmatpush.msra.mxu0 %v1798
    %v1800 = vand.u32 %v1476, 4294901760
    %v1801 = vsub.f32 %v1476, %v1800
    %1802 = vmatpush.msra.mxu0 %v1801
    %v1803 = vand.u32 %v1472, 4294901760
    %v1804 = vsub.f32 %v1472, %v1803
    %1805 = vmatpush.msra.mxu0 %v1804
    %v1806 = vand.u32 %v1492, 4294901760
    %v1807 = vsub.f32 %v1492, %v1806
    %1808 = vmatmul.f32.gmra.mxu0 %v1807
    %v1809 = vpop.f32.mrf.mxu0
    %v1810 = vadd.f32 %v1778, %v1809
    %1811 = vdwg.mxu0
    %1812 = vmatpush.msra.mxu0 0.0
    %1813 = vmatpush.msra.mxu0 0.0
    %1814 = vmatpush.msra.mxu0 0.0
    %1815 = vmatpush.msra.mxu0 0.0
    %1816 = vmatpush.msra.mxu0 0.0
    %1817 = vmatpush.msra.mxu0 0.0
    %1818 = vmatpush.msra.mxu0 0.0
    %1819 = vmatpush.msra.mxu0 0.0
    %1820 = vmatpush.msra.mxu0 0.0
    %1821 = vmatpush.msra.mxu0 0.0
    %1822 = vmatpush.msra.mxu0 0.0
    %v1823 = vand.u32 %v1498, 4294901760
    %1824 = vmatpush.msra.mxu0 %v1823
    %v1825 = vand.u32 %v1484, 4294901760
    %1826 = vmatpush.msra.mxu0 %v1825
    %v1827 = vand.u32 %v1480, 4294901760
    %1828 = vmatpush.msra.mxu0 %v1827
    %v1829 = vand.u32 %v1476, 4294901760
    %1830 = vmatpush.msra.mxu0 %v1829
    %v1831 = vand.u32 %v1472, 4294901760
    %1832 = vmatpush.msra.mxu0 %v1831
    %v1833 = vand.u32 %v1492, 4294901760
    %v1834 = vsub.f32 %v1492, %v1833
    %v1835 = vand.u32 %v1834, 4294901760
    %1836 = vmatmul.f32.gmra.mxu0 %v1835
    %v1837 = vpop.f32.mrf.mxu0
    %v1838 = vadd.f32 %v1810, %v1837
    %1839 = vdwg.mxu0
    %1840 = vmatpush.msra.mxu0 0.0
    %1841 = vmatpush.msra.mxu0 0.0
    %1842 = vmatpush.msra.mxu0 0.0
    %1843 = vmatpush.msra.mxu0 0.0
    %1844 = vmatpush.msra.mxu0 0.0
    %1845 = vmatpush.msra.mxu0 0.0
    %1846 = vmatpush.msra.mxu0 0.0
    %1847 = vmatpush.msra.mxu0 0.0
    %1848 = vmatpush.msra.mxu0 0.0
    %1849 = vmatpush.msra.mxu0 0.0
    %1850 = vmatpush.msra.mxu0 0.0
    %v1851 = vand.u32 %v1498, 4294901760
    %v1852 = vsub.f32 %v1498, %v1851
    %v1853 = vand.u32 %v1852, 4294901760
    %1854 = vmatpush.msra.mxu0 %v1853
    %v1855 = vand.u32 %v1484, 4294901760
    %v1856 = vsub.f32 %v1484, %v1855
    %v1857 = vand.u32 %v1856, 4294901760
    %1858 = vmatpush.msra.mxu0 %v1857
    %v1859 = vand.u32 %v1480, 4294901760
    %v1860 = vsub.f32 %v1480, %v1859
    %v1861 = vand.u32 %v1860, 4294901760
    %1862 = vmatpush.msra.mxu0 %v1861
    %v1863 = vand.u32 %v1476, 4294901760
    %v1864 = vsub.f32 %v1476, %v1863
    %v1865 = vand.u32 %v1864, 4294901760
    %1866 = vmatpush.msra.mxu0 %v1865
    %v1867 = vand.u32 %v1472, 4294901760
    %v1868 = vsub.f32 %v1472, %v1867
    %v1869 = vand.u32 %v1868, 4294901760
    %1870 = vmatpush.msra.mxu0 %v1869
    %v1871 = vand.u32 %v1492, 4294901760
    %1872 = vmatmul.f32.gmra.mxu0 %v1871
    %v1873 = vpop.f32.mrf.mxu0
    %v1874 = vadd.f32 %v1838, %v1873
    %1875 = vdwg.mxu0
    %1876 = vmatpush.msra.mxu0 0.0
    %1877 = vmatpush.msra.mxu0 0.0
    %1878 = vmatpush.msra.mxu0 0.0
    %1879 = vmatpush.msra.mxu0 0.0
    %1880 = vmatpush.msra.mxu0 0.0
    %1881 = vmatpush.msra.mxu0 0.0
    %1882 = vmatpush.msra.mxu0 0.0
    %1883 = vmatpush.msra.mxu0 0.0
    %1884 = vmatpush.msra.mxu0 0.0
    %1885 = vmatpush.msra.mxu0 0.0
    %1886 = vmatpush.msra.mxu0 0.0
    %v1887 = vand.u32 %v1498, 4294901760
    %1888 = vmatpush.msra.mxu0 %v1887
    %v1889 = vand.u32 %v1484, 4294901760
    %1890 = vmatpush.msra.mxu0 %v1889
    %v1891 = vand.u32 %v1480, 4294901760
    %1892 = vmatpush.msra.mxu0 %v1891
    %v1893 = vand.u32 %v1476, 4294901760
    %1894 = vmatpush.msra.mxu0 %v1893
    %v1895 = vand.u32 %v1472, 4294901760
    %1896 = vmatpush.msra.mxu0 %v1895
    %v1897 = vand.u32 %v1492, 4294901760
    %1898 = vmatmul.f32.gmra.mxu0 %v1897
    %v1899 = vpop.f32.mrf.mxu0
    %v1900 = vadd.f32 %v1874, %v1899
    %1901 = vdwg.mxu0
    %1902 = vmatpush.msra.mxu0 0.0
    %1903 = vmatpush.msra.mxu0 0.0
    %1904 = vmatpush.msra.mxu0 0.0
    %1905 = vmatpush.msra.mxu0 0.0
    %1906 = vmatpush.msra.mxu0 0.0
    %1907 = vmatpush.msra.mxu0 0.0
    %1908 = vmatpush.msra.mxu0 0.0
    %1909 = vmatpush.msra.mxu0 0.0
    %1910 = vmatpush.msra.mxu0 0.0
    %1911 = vmatpush.msra.mxu0 0.0
    %1912 = vmatpush.msra.mxu0 0.0
    %v1913 = vand.u32 %v1501, 4294901760
    %1914 = vmatpush.msra.mxu0 %v1913
    %v1915 = vand.u32 %v1485, 4294901760
    %1916 = vmatpush.msra.mxu0 %v1915
    %v1917 = vand.u32 %v1481, 4294901760
    %1918 = vmatpush.msra.mxu0 %v1917
    %v1919 = vand.u32 %v1477, 4294901760
    %1920 = vmatpush.msra.mxu0 %v1919
    %v1921 = vand.u32 %v1473, 4294901760
    %1922 = vmatpush.msra.mxu0 %v1921
    %v1923 = vand.u32 %v1492, 4294901760
    %v1924 = vsub.f32 %v1492, %v1923
    %v1925 = vand.u32 %v1924, 4294901760
    %v1926 = vsub.f32 %v1924, %v1925
    %v1927 = vand.u32 %v1926, 4294901760
    %1928 = vmatmul.f32.gmra.mxu0 %v1927
    %v1929 = vpop.f32.mrf.mxu0
    %v1930 = vadd.f32 %v1489, %v1929
    %1931 = vdwg.mxu0
    %1932 = vmatpush.msra.mxu0 0.0
    %1933 = vmatpush.msra.mxu0 0.0
    %1934 = vmatpush.msra.mxu0 0.0
    %1935 = vmatpush.msra.mxu0 0.0
    %1936 = vmatpush.msra.mxu0 0.0
    %1937 = vmatpush.msra.mxu0 0.0
    %1938 = vmatpush.msra.mxu0 0.0
    %1939 = vmatpush.msra.mxu0 0.0
    %1940 = vmatpush.msra.mxu0 0.0
    %1941 = vmatpush.msra.mxu0 0.0
    %1942 = vmatpush.msra.mxu0 0.0
    %v1943 = vand.u32 %v1501, 4294901760
    %v1944 = vsub.f32 %v1501, %v1943
    %v1945 = vand.u32 %v1944, 4294901760
    %v1946 = vsub.f32 %v1944, %v1945
    %v1947 = vand.u32 %v1946, 4294901760
    %1948 = vmatpush.msra.mxu0 %v1947
    %v1949 = vand.u32 %v1485, 4294901760
    %v1950 = vsub.f32 %v1485, %v1949
    %v1951 = vand.u32 %v1950, 4294901760
    %v1952 = vsub.f32 %v1950, %v1951
    %v1953 = vand.u32 %v1952, 4294901760
    %1954 = vmatpush.msra.mxu0 %v1953
    %v1955 = vand.u32 %v1481, 4294901760
    %v1956 = vsub.f32 %v1481, %v1955
    %v1957 = vand.u32 %v1956, 4294901760
    %v1958 = vsub.f32 %v1956, %v1957
    %v1959 = vand.u32 %v1958, 4294901760
    %1960 = vmatpush.msra.mxu0 %v1959
    %v1961 = vand.u32 %v1477, 4294901760
    %v1962 = vsub.f32 %v1477, %v1961
    %v1963 = vand.u32 %v1962, 4294901760
    %v1964 = vsub.f32 %v1962, %v1963
    %v1965 = vand.u32 %v1964, 4294901760
    %1966 = vmatpush.msra.mxu0 %v1965
    %v1967 = vand.u32 %v1473, 4294901760
    %v1968 = vsub.f32 %v1473, %v1967
    %v1969 = vand.u32 %v1968, 4294901760
    %v1970 = vsub.f32 %v1968, %v1969
    %v1971 = vand.u32 %v1970, 4294901760
    %1972 = vmatpush.msra.mxu0 %v1971
    %v1973 = vand.u32 %v1492, 4294901760
    %1974 = vmatmul.f32.gmra.mxu0 %v1973
    %v1975 = vpop.f32.mrf.mxu0
    %v1976 = vadd.f32 %v1930, %v1975
    %1977 = vdwg.mxu0
    %1978 = vmatpush.msra.mxu0 0.0
    %1979 = vmatpush.msra.mxu0 0.0
    %1980 = vmatpush.msra.mxu0 0.0
    %1981 = vmatpush.msra.mxu0 0.0
    %1982 = vmatpush.msra.mxu0 0.0
    %1983 = vmatpush.msra.mxu0 0.0
    %1984 = vmatpush.msra.mxu0 0.0
    %1985 = vmatpush.msra.mxu0 0.0
    %1986 = vmatpush.msra.mxu0 0.0
    %1987 = vmatpush.msra.mxu0 0.0
    %1988 = vmatpush.msra.mxu0 0.0
    %v1989 = vand.u32 %v1501, 4294901760
    %v1990 = vsub.f32 %v1501, %v1989
    %1991 = vmatpush.msra.mxu0 %v1990
    %v1992 = vand.u32 %v1485, 4294901760
    %v1993 = vsub.f32 %v1485, %v1992
    %1994 = vmatpush.msra.mxu0 %v1993
    %v1995 = vand.u32 %v1481, 4294901760
    %v1996 = vsub.f32 %v1481, %v1995
    %1997 = vmatpush.msra.mxu0 %v1996
    %v1998 = vand.u32 %v1477, 4294901760
    %v1999 = vsub.f32 %v1477, %v1998
    %2000 = vmatpush.msra.mxu0 %v1999
    %v2001 = vand.u32 %v1473, 4294901760
    %v2002 = vsub.f32 %v1473, %v2001
    %2003 = vmatpush.msra.mxu0 %v2002
    %v2004 = vand.u32 %v1492, 4294901760
    %v2005 = vsub.f32 %v1492, %v2004
    %2006 = vmatmul.f32.gmra.mxu0 %v2005
    %v2007 = vpop.f32.mrf.mxu0
    %v2008 = vadd.f32 %v1976, %v2007
    %2009 = vdwg.mxu0
    %2010 = vmatpush.msra.mxu0 0.0
    %2011 = vmatpush.msra.mxu0 0.0
    %2012 = vmatpush.msra.mxu0 0.0
    %2013 = vmatpush.msra.mxu0 0.0
    %2014 = vmatpush.msra.mxu0 0.0
    %2015 = vmatpush.msra.mxu0 0.0
    %2016 = vmatpush.msra.mxu0 0.0
    %2017 = vmatpush.msra.mxu0 0.0
    %2018 = vmatpush.msra.mxu0 0.0
    %2019 = vmatpush.msra.mxu0 0.0
    %2020 = vmatpush.msra.mxu0 0.0
    %v2021 = vand.u32 %v1501, 4294901760
    %2022 = vmatpush.msra.mxu0 %v2021
    %v2023 = vand.u32 %v1485, 4294901760
    %2024 = vmatpush.msra.mxu0 %v2023
    %v2025 = vand.u32 %v1481, 4294901760
    %2026 = vmatpush.msra.mxu0 %v2025
    %v2027 = vand.u32 %v1477, 4294901760
    %2028 = vmatpush.msra.mxu0 %v2027
    %v2029 = vand.u32 %v1473, 4294901760
    %2030 = vmatpush.msra.mxu0 %v2029
    %v2031 = vand.u32 %v1492, 4294901760
    %v2032 = vsub.f32 %v1492, %v2031
    %v2033 = vand.u32 %v2032, 4294901760
    %2034 = vmatmul.f32.gmra.mxu0 %v2033
    %v2035 = vpop.f32.mrf.mxu0
    %v2036 = vadd.f32 %v2008, %v2035
    %2037 = vdwg.mxu0
    %2038 = vmatpush.msra.mxu0 0.0
    %2039 = vmatpush.msra.mxu0 0.0
    %2040 = vmatpush.msra.mxu0 0.0
    %2041 = vmatpush.msra.mxu0 0.0
    %2042 = vmatpush.msra.mxu0 0.0
    %2043 = vmatpush.msra.mxu0 0.0
    %2044 = vmatpush.msra.mxu0 0.0
    %2045 = vmatpush.msra.mxu0 0.0
    %2046 = vmatpush.msra.mxu0 0.0
    %2047 = vmatpush.msra.mxu0 0.0
    %2048 = vmatpush.msra.mxu0 0.0
    %v2049 = vand.u32 %v1501, 4294901760
    %v2050 = vsub.f32 %v1501, %v2049
    %v2051 = vand.u32 %v2050, 4294901760
    %2052 = vmatpush.msra.mxu0 %v2051
    %v2053 = vand.u32 %v1485, 4294901760
    %v2054 = vsub.f32 %v1485, %v2053
    %v2055 = vand.u32 %v2054, 4294901760
    %2056 = vmatpush.msra.mxu0 %v2055
    %v2057 = vand.u32 %v1481, 4294901760
    %v2058 = vsub.f32 %v1481, %v2057
    %v2059 = vand.u32 %v2058, 4294901760
    %2060 = vmatpush.msra.mxu0 %v2059
    %v2061 = vand.u32 %v1477, 4294901760
    %v2062 = vsub.f32 %v1477, %v2061
    %v2063 = vand.u32 %v2062, 4294901760
    %2064 = vmatpush.msra.mxu0 %v2063
    %v2065 = vand.u32 %v1473, 4294901760
    %v2066 = vsub.f32 %v1473, %v2065
    %v2067 = vand.u32 %v2066, 4294901760
    %2068 = vmatpush.msra.mxu0 %v2067
    %v2069 = vand.u32 %v1492, 4294901760
    %2070 = vmatmul.f32.gmra.mxu0 %v2069
    %v2071 = vpop.f32.mrf.mxu0
    %v2072 = vadd.f32 %v2036, %v2071
    %2073 = vdwg.mxu0
    %2074 = vmatpush.msra.mxu0 0.0
    %2075 = vmatpush.msra.mxu0 0.0
    %2076 = vmatpush.msra.mxu0 0.0
    %2077 = vmatpush.msra.mxu0 0.0
    %2078 = vmatpush.msra.mxu0 0.0
    %2079 = vmatpush.msra.mxu0 0.0
    %2080 = vmatpush.msra.mxu0 0.0
    %2081 = vmatpush.msra.mxu0 0.0
    %2082 = vmatpush.msra.mxu0 0.0
    %2083 = vmatpush.msra.mxu0 0.0
    %2084 = vmatpush.msra.mxu0 0.0
    %v2085 = vand.u32 %v1501, 4294901760
    %2086 = vmatpush.msra.mxu0 %v2085
    %v2087 = vand.u32 %v1485, 4294901760
    %2088 = vmatpush.msra.mxu0 %v2087
    %v2089 = vand.u32 %v1481, 4294901760
    %2090 = vmatpush.msra.mxu0 %v2089
    %v2091 = vand.u32 %v1477, 4294901760
    %2092 = vmatpush.msra.mxu0 %v2091
    %v2093 = vand.u32 %v1473, 4294901760
    %2094 = vmatpush.msra.mxu0 %v2093
    %v2095 = vand.u32 %v1492, 4294901760
    %2096 = vmatmul.f32.gmra.mxu0 %v2095
    %v2097 = vpop.f32.mrf.mxu0
    %v2098 = vadd.f32 %v2072, %v2097
    %2099 = vdwg.mxu0
    %2100 = vmatpush.msra.mxu0 0.0
    %2101 = vmatpush.msra.mxu0 0.0
    %2102 = vmatpush.msra.mxu0 0.0
    %2103 = vmatpush.msra.mxu0 0.0
    %2104 = vmatpush.msra.mxu0 0.0
    %2105 = vmatpush.msra.mxu0 0.0
    %2106 = vmatpush.msra.mxu0 0.0
    %2107 = vmatpush.msra.mxu0 0.0
    %2108 = vmatpush.msra.mxu0 0.0
    %2109 = vmatpush.msra.mxu0 0.0
    %2110 = vmatpush.msra.mxu0 0.0
    %v2111 = vand.u32 %v1504, 4294901760
    %2112 = vmatpush.msra.mxu0 %v2111
    %v2113 = vand.u32 %v1486, 4294901760
    %2114 = vmatpush.msra.mxu0 %v2113
    %v2115 = vand.u32 %v1482, 4294901760
    %2116 = vmatpush.msra.mxu0 %v2115
    %v2117 = vand.u32 %v1478, 4294901760
    %2118 = vmatpush.msra.mxu0 %v2117
    %v2119 = vand.u32 %v1474, 4294901760
    %2120 = vmatpush.msra.mxu0 %v2119
    %v2121 = vand.u32 %v1492, 4294901760
    %v2122 = vsub.f32 %v1492, %v2121
    %v2123 = vand.u32 %v2122, 4294901760
    %v2124 = vsub.f32 %v2122, %v2123
    %v2125 = vand.u32 %v2124, 4294901760
    %2126 = vmatmul.f32.gmra.mxu0 %v2125
    %v2127 = vpop.f32.mrf.mxu0
    %v2128 = vadd.f32 %v1489, %v2127
    %2129 = vdwg.mxu0
    %2130 = vmatpush.msra.mxu0 0.0
    %2131 = vmatpush.msra.mxu0 0.0
    %2132 = vmatpush.msra.mxu0 0.0
    %2133 = vmatpush.msra.mxu0 0.0
    %2134 = vmatpush.msra.mxu0 0.0
    %2135 = vmatpush.msra.mxu0 0.0
    %2136 = vmatpush.msra.mxu0 0.0
    %2137 = vmatpush.msra.mxu0 0.0
    %2138 = vmatpush.msra.mxu0 0.0
    %2139 = vmatpush.msra.mxu0 0.0
    %2140 = vmatpush.msra.mxu0 0.0
    %v2141 = vand.u32 %v1504, 4294901760
    %v2142 = vsub.f32 %v1504, %v2141
    %v2143 = vand.u32 %v2142, 4294901760
    %v2144 = vsub.f32 %v2142, %v2143
    %v2145 = vand.u32 %v2144, 4294901760
    %2146 = vmatpush.msra.mxu0 %v2145
    %v2147 = vand.u32 %v1486, 4294901760
    %v2148 = vsub.f32 %v1486, %v2147
    %v2149 = vand.u32 %v2148, 4294901760
    %v2150 = vsub.f32 %v2148, %v2149
    %v2151 = vand.u32 %v2150, 4294901760
    %2152 = vmatpush.msra.mxu0 %v2151
    %v2153 = vand.u32 %v1482, 4294901760
    %v2154 = vsub.f32 %v1482, %v2153
    %v2155 = vand.u32 %v2154, 4294901760
    %v2156 = vsub.f32 %v2154, %v2155
    %v2157 = vand.u32 %v2156, 4294901760
    %2158 = vmatpush.msra.mxu0 %v2157
    %v2159 = vand.u32 %v1478, 4294901760
    %v2160 = vsub.f32 %v1478, %v2159
    %v2161 = vand.u32 %v2160, 4294901760
    %v2162 = vsub.f32 %v2160, %v2161
    %v2163 = vand.u32 %v2162, 4294901760
    %2164 = vmatpush.msra.mxu0 %v2163
    %v2165 = vand.u32 %v1474, 4294901760
    %v2166 = vsub.f32 %v1474, %v2165
    %v2167 = vand.u32 %v2166, 4294901760
    %v2168 = vsub.f32 %v2166, %v2167
    %v2169 = vand.u32 %v2168, 4294901760
    %2170 = vmatpush.msra.mxu0 %v2169
    %v2171 = vand.u32 %v1492, 4294901760
    %2172 = vmatmul.f32.gmra.mxu0 %v2171
    %v2173 = vpop.f32.mrf.mxu0
    %v2174 = vadd.f32 %v2128, %v2173
    %2175 = vdwg.mxu0
    %2176 = vmatpush.msra.mxu0 0.0
    %2177 = vmatpush.msra.mxu0 0.0
    %2178 = vmatpush.msra.mxu0 0.0
    %2179 = vmatpush.msra.mxu0 0.0
    %2180 = vmatpush.msra.mxu0 0.0
    %2181 = vmatpush.msra.mxu0 0.0
    %2182 = vmatpush.msra.mxu0 0.0
    %2183 = vmatpush.msra.mxu0 0.0
    %2184 = vmatpush.msra.mxu0 0.0
    %2185 = vmatpush.msra.mxu0 0.0
    %2186 = vmatpush.msra.mxu0 0.0
    %v2187 = vand.u32 %v1504, 4294901760
    %v2188 = vsub.f32 %v1504, %v2187
    %2189 = vmatpush.msra.mxu0 %v2188
    %v2190 = vand.u32 %v1486, 4294901760
    %v2191 = vsub.f32 %v1486, %v2190
    %2192 = vmatpush.msra.mxu0 %v2191
    %v2193 = vand.u32 %v1482, 4294901760
    %v2194 = vsub.f32 %v1482, %v2193
    %2195 = vmatpush.msra.mxu0 %v2194
    %v2196 = vand.u32 %v1478, 4294901760
    %v2197 = vsub.f32 %v1478, %v2196
    %2198 = vmatpush.msra.mxu0 %v2197
    %v2199 = vand.u32 %v1474, 4294901760
    %v2200 = vsub.f32 %v1474, %v2199
    %2201 = vmatpush.msra.mxu0 %v2200
    %v2202 = vand.u32 %v1492, 4294901760
    %v2203 = vsub.f32 %v1492, %v2202
    %2204 = vmatmul.f32.gmra.mxu0 %v2203
    %v2205 = vpop.f32.mrf.mxu0
    %v2206 = vadd.f32 %v2174, %v2205
    %2207 = vdwg.mxu0
    %2208 = vmatpush.msra.mxu0 0.0
    %2209 = vmatpush.msra.mxu0 0.0
    %2210 = vmatpush.msra.mxu0 0.0
    %2211 = vmatpush.msra.mxu0 0.0
    %2212 = vmatpush.msra.mxu0 0.0
    %2213 = vmatpush.msra.mxu0 0.0
    %2214 = vmatpush.msra.mxu0 0.0
    %2215 = vmatpush.msra.mxu0 0.0
    %2216 = vmatpush.msra.mxu0 0.0
    %2217 = vmatpush.msra.mxu0 0.0
    %2218 = vmatpush.msra.mxu0 0.0
    %v2219 = vand.u32 %v1504, 4294901760
    %2220 = vmatpush.msra.mxu0 %v2219
    %v2221 = vand.u32 %v1486, 4294901760
    %2222 = vmatpush.msra.mxu0 %v2221
    %v2223 = vand.u32 %v1482, 4294901760
    %2224 = vmatpush.msra.mxu0 %v2223
    %v2225 = vand.u32 %v1478, 4294901760
    %2226 = vmatpush.msra.mxu0 %v2225
    %v2227 = vand.u32 %v1474, 4294901760
    %2228 = vmatpush.msra.mxu0 %v2227
    %v2229 = vand.u32 %v1492, 4294901760
    %v2230 = vsub.f32 %v1492, %v2229
    %v2231 = vand.u32 %v2230, 4294901760
    %2232 = vmatmul.f32.gmra.mxu0 %v2231
    %v2233 = vpop.f32.mrf.mxu0
    %v2234 = vadd.f32 %v2206, %v2233
    %2235 = vdwg.mxu0
    %2236 = vmatpush.msra.mxu0 0.0
    %2237 = vmatpush.msra.mxu0 0.0
    %2238 = vmatpush.msra.mxu0 0.0
    %2239 = vmatpush.msra.mxu0 0.0
    %2240 = vmatpush.msra.mxu0 0.0
    %2241 = vmatpush.msra.mxu0 0.0
    %2242 = vmatpush.msra.mxu0 0.0
    %2243 = vmatpush.msra.mxu0 0.0
    %2244 = vmatpush.msra.mxu0 0.0
    %2245 = vmatpush.msra.mxu0 0.0
    %2246 = vmatpush.msra.mxu0 0.0
    %v2247 = vand.u32 %v1504, 4294901760
    %v2248 = vsub.f32 %v1504, %v2247
    %v2249 = vand.u32 %v2248, 4294901760
    %2250 = vmatpush.msra.mxu0 %v2249
    %v2251 = vand.u32 %v1486, 4294901760
    %v2252 = vsub.f32 %v1486, %v2251
    %v2253 = vand.u32 %v2252, 4294901760
    %2254 = vmatpush.msra.mxu0 %v2253
    %v2255 = vand.u32 %v1482, 4294901760
    %v2256 = vsub.f32 %v1482, %v2255
    %v2257 = vand.u32 %v2256, 4294901760
    %2258 = vmatpush.msra.mxu0 %v2257
    %v2259 = vand.u32 %v1478, 4294901760
    %v2260 = vsub.f32 %v1478, %v2259
    %v2261 = vand.u32 %v2260, 4294901760
    %2262 = vmatpush.msra.mxu0 %v2261
    %v2263 = vand.u32 %v1474, 4294901760
    %v2264 = vsub.f32 %v1474, %v2263
    %v2265 = vand.u32 %v2264, 4294901760
    %2266 = vmatpush.msra.mxu0 %v2265
    %v2267 = vand.u32 %v1492, 4294901760
    %2268 = vmatmul.f32.gmra.mxu0 %v2267
    %v2269 = vpop.f32.mrf.mxu0
    %v2270 = vadd.f32 %v2234, %v2269
    %2271 = vdwg.mxu0
    %2272 = vmatpush.msra.mxu0 0.0
    %2273 = vmatpush.msra.mxu0 0.0
    %2274 = vmatpush.msra.mxu0 0.0
    %2275 = vmatpush.msra.mxu0 0.0
    %2276 = vmatpush.msra.mxu0 0.0
    %2277 = vmatpush.msra.mxu0 0.0
    %2278 = vmatpush.msra.mxu0 0.0
    %2279 = vmatpush.msra.mxu0 0.0
    %2280 = vmatpush.msra.mxu0 0.0
    %2281 = vmatpush.msra.mxu0 0.0
    %2282 = vmatpush.msra.mxu0 0.0
    %v2283 = vand.u32 %v1504, 4294901760
    %2284 = vmatpush.msra.mxu0 %v2283
    %v2285 = vand.u32 %v1486, 4294901760
    %2286 = vmatpush.msra.mxu0 %v2285
    %v2287 = vand.u32 %v1482, 4294901760
    %2288 = vmatpush.msra.mxu0 %v2287
    %v2289 = vand.u32 %v1478, 4294901760
    %2290 = vmatpush.msra.mxu0 %v2289
    %v2291 = vand.u32 %v1474, 4294901760
    %2292 = vmatpush.msra.mxu0 %v2291
    %v2293 = vand.u32 %v1492, 4294901760
    %2294 = vmatmul.f32.gmra.mxu0 %v2293
    %v2295 = vpop.f32.mrf.mxu0
    %v2296 = vadd.f32 %v2270, %v2295
    %2297 = vdwg.mxu0
    %v2298 = vmax.f32 %v1702, 0.0
    %v2299 = vmax.f32 %v1900, 0.0
    %v2300 = vmax.f32 %v2098, 0.0
    %v2301 = vmax.f32 %v2296, 0.0
    %2302 = vset.pattern.permute.xlu0 2
    %2303 = vperm.xlu0 %2302, %v120
    %v2304 = vpop.permute.xlu0 %2303
    %v2306 = vmul.f32 %v2298, %v2304
    %v2307 = vmul.f32 %v2299, %v2304
    %v2308 = vmul.f32 %v2300, %v2304
    %v2309 = vmul.f32 %v2301, %v2304
    %v2310 = vsel %vm103, %v2306, 0.0
    %v2311 = vrot.slane %v2310, 4
    %v2312 = vadd.f32 %v2310, %v2311
    %v2313 = vrot.slane %v2312, 2
    %v2314 = vadd.f32 %v2312, %v2313
    %v2315 = vrot.slane %v2314, 1
    %v2316 = vadd.f32 %v2314, %v2315
    %v2317 = vsel %vm103, %v2307, 0.0
    %v2318 = vrot.slane %v2317, 4
    %v2319 = vadd.f32 %v2317, %v2318
    %v2320 = vrot.slane %v2319, 2
    %v2321 = vadd.f32 %v2319, %v2320
    %v2322 = vrot.slane %v2321, 1
    %v2323 = vadd.f32 %v2321, %v2322
    %v2324 = vsel %vm103, %v2308, 0.0
    %v2325 = vrot.slane %v2324, 4
    %v2326 = vadd.f32 %v2324, %v2325
    %v2327 = vrot.slane %v2326, 2
    %v2328 = vadd.f32 %v2326, %v2327
    %v2329 = vrot.slane %v2328, 1
    %v2330 = vadd.f32 %v2328, %v2329
    %v2331 = vsel %vm103, %v2309, 0.0
    %v2332 = vrot.slane %v2331, 4
    %v2333 = vadd.f32 %v2331, %v2332
    %v2334 = vrot.slane %v2333, 2
    %v2335 = vadd.f32 %v2333, %v2334
    %v2336 = vrot.slane %v2335, 1
    %v2337 = vadd.f32 %v2335, %v2336
    %2338 = vset.pattern.permute.xlu0 3
    %2339 = vperm.xlu0 %2338, %v120
    %v2340 = vpop.permute.xlu0 %2339
    %v2342 = vadd.f32 %v2316, %v2340
    %v2343 = vadd.f32 %v2323, %v2340
    %v2344 = vadd.f32 %v2330, %v2340
    %v2345 = vadd.f32 %v2337, %v2340
    %v2346 = vxor.u32 %v2342, 2147483648
    %v2347 = vxor.u32 %v2343, 2147483648
    %v2348 = vxor.u32 %v2344, 2147483648
    %v2349 = vxor.u32 %v2345, 2147483648
    %v2350 = vmul.f32 %v2346, 1.442695
    %v2351 = vpow.pop %v2350
    %v2352 = vmul.f32 %v2347, 1.442695
    %v2353 = vpow.pop %v2352
    %v2354 = vmul.f32 %v2348, 1.442695
    %v2355 = vpow.pop %v2354
    %v2356 = vmul.f32 %v2349, 1.442695
    %v2357 = vpow.pop %v2356
    %v2358 = vadd.f32 %v2351, 1.0
    %v2359 = vadd.f32 %v2353, 1.0
    %v2360 = vadd.f32 %v2355, 1.0
    %v2361 = vadd.f32 %v2357, 1.0
    %v2362 = vrcp.pop %v2358
    %v2363 = vmul.f32 %v2358, %v2362
    %v2364 = vsub.f32 1.0, %v2363
    %v2365 = vmul.f32 %v2362, %v2364
    %v2366 = vadd.f32 %v2362, %v2365
    %vm2367 = vweird.f32 %v2358
    %vm2368 = vweird.f32 %v2362
    %vm2369 = vmor %vm2367, %vm2368
    %v2370 = vsel %vm2369, %v2362, %v2366
    %v2371 = vand.u32 2147483647, %v2358
    %vm2372 = vcmp.eq.f32.partialorder %v2371, 8.507059e+37
    %v2373 = vand.u32 %v2358, 2147483648
    %v2374 = vor.u32 1.1754944e-38, %v2373
    %v2375 = vsel %vm2372, %v2374, %v2370
    %v2376 = vmul.f32 1.0, %v2375
    %v2377 = vrcp.pop %v2359
    %v2378 = vmul.f32 %v2359, %v2377
    %v2379 = vsub.f32 1.0, %v2378
    %v2380 = vmul.f32 %v2377, %v2379
    %v2381 = vadd.f32 %v2377, %v2380
    %vm2382 = vweird.f32 %v2359
    %vm2383 = vweird.f32 %v2377
    %vm2384 = vmor %vm2382, %vm2383
    %v2385 = vsel %vm2384, %v2377, %v2381
    %v2386 = vand.u32 2147483647, %v2359
    %vm2387 = vcmp.eq.f32.partialorder %v2386, 8.507059e+37
    %v2388 = vand.u32 %v2359, 2147483648
    %v2389 = vor.u32 1.1754944e-38, %v2388
    %v2390 = vsel %vm2387, %v2389, %v2385
    %v2391 = vmul.f32 1.0, %v2390
    %v2392 = vrcp.pop %v2360
    %v2393 = vmul.f32 %v2360, %v2392
    %v2394 = vsub.f32 1.0, %v2393
    %v2395 = vmul.f32 %v2392, %v2394
    %v2396 = vadd.f32 %v2392, %v2395
    %vm2397 = vweird.f32 %v2360
    %vm2398 = vweird.f32 %v2392
    %vm2399 = vmor %vm2397, %vm2398
    %v2400 = vsel %vm2399, %v2392, %v2396
    %v2401 = vand.u32 2147483647, %v2360
    %vm2402 = vcmp.eq.f32.partialorder %v2401, 8.507059e+37
    %v2403 = vand.u32 %v2360, 2147483648
    %v2404 = vor.u32 1.1754944e-38, %v2403
    %v2405 = vsel %vm2402, %v2404, %v2400
    %v2406 = vmul.f32 1.0, %v2405
    %v2407 = vrcp.pop %v2361
    %v2408 = vmul.f32 %v2361, %v2407
    %v2409 = vsub.f32 1.0, %v2408
    %v2410 = vmul.f32 %v2407, %v2409
    %v2411 = vadd.f32 %v2407, %v2410
    %vm2412 = vweird.f32 %v2361
    %vm2413 = vweird.f32 %v2407
    %vm2414 = vmor %vm2412, %vm2413
    %v2415 = vsel %vm2414, %v2407, %v2411
    %v2416 = vand.u32 2147483647, %v2361
    %vm2417 = vcmp.eq.f32.partialorder %v2416, 8.507059e+37
    %v2418 = vand.u32 %v2361, 2147483648
    %v2419 = vor.u32 1.1754944e-38, %v2418
    %v2420 = vsel %vm2417, %v2419, %v2415
    %v2421 = vmul.f32 1.0, %v2420
    %v2426 = vrot.slane %v2391, 7
    %v2427 = vrot.slane %v2406, 6
    %v2428 = vrot.slane %v2421, 5
    %vm2429 = vcmask 1040384
    %v2430 = vsel %vm2429, %v2376, %v2426
    %vm2431 = vcmask 1042434
    %v2432 = vsel %vm2431, %v2427, %v2428
    %vm2433 = vcmask 1041408
    %v2434 = vsel %vm2433, %v2430, %v2432
    %v2436 = vlaneseq
    %vm2437 = vcmp.ge.s32.totalorder %v2436, 0
    %vm2438 = vcmp.lt.s32.totalorder %v2436, 512
    %vm2439 = vmand %vm2437, %vm2438
    %2440 = vst.msk [vmem:[#allocation11] sm:$0xf] %vm2439, %v2434
    // Predicated region
    $region42: #{tpu_custom_call.1} parent=1 // pred_check
      _
    $region43: #{tpu_custom_call.1} parent=1 // pred_check_branch
      %2442 = sbr.rel (0) target = $region45
    $region44: #{tpu_custom_call.1} parent=1 // pred_region
      %2444 = vsyncadd [#allocation4], 0
      %s2446 = sshll.u32 [#allocation11], 4
      %s2447 = int_to_ptr.vmem [resolvable:$true] %s2446
      %s2448 = sshll.u32 %s5, 4
      %s2449 = int_to_ptr.hbm [resolvable:$true] %s2448
      %2451 = dma.vmem_to_hbm [thread:$0]  %s2447, 64, %s2449, [#allocation4]
    $region45: #{tpu_custom_call.1} parent=1 // pred_fallthru
      _
    // Predicated region
    $region46: #{tpu_custom_call.1} parent=1 // pred_check
      _
    $region47: #{tpu_custom_call.1} parent=1 // pred_check_branch
      %2453 = sbr.rel (0) target = $region49
    $region48: #{tpu_custom_call.1} parent=1 // pred_region
      %2455 = dma.done [#allocation4], 64
    $region49: #{tpu_custom_call.1} parent=1 // pred_fallthru
      _
    %2456 = vsyncpa [#allocation3], 1
    %2457 = vsyncpa [#allocation6], 1
    %2458 = vsyncpa [#allocation9], 1
    %2459 = vsyncpa [#allocation4], 1

</llo_original>
